<compile_context>
chip_gen: v7x
topology: tpu7x:2x2x1
jax: 0.10.0
libtpu: 0.0.40
codegen_flags: <defaults>
</compile_context>

<pallas_src>
import functools

import jax
import jax.numpy as jnp
from jax.experimental import pallas as pl
from jax.experimental.pallas import tpu as pltpu


def _uncl_kernel(fs_ref, lv_ref, ft_ref, wp_ref, wn_ref, out_ref,
                 lhs_ref, arow_ref, *, td, compute_dtype):
    # fs_ref  : (TM, D)     student features (full feature axis; chunked below)
    # lv_ref  : (TM, D)     student log-variance
    # ft_ref  : (TN, D)     teacher feature tile
    # wp_ref  : (TM, TN)    mask / pos_cnt          (precomputed in wrapper)
    # wn_ref  : (TM, TN)    (1-mask) / neg_cnt      (precomputed in wrapper)
    # out_ref : (TM, TN)    lane-dense per-row accumulator, resident across j
    # lhs_ref : (TM, 2*D)   scratch: [inv, -2*fs*inv]   (i-only, hoisted)
    # arow_ref: (TM, 1)     scratch: A[i] = sum_d(fs^2*inv + 0.5*lv)
    j = pl.program_id(1)
    tm, d_full = fs_ref.shape
    tn = ft_ref.shape[0]
    n_chunks = d_full // td
    cdt = compute_dtype

    # ---- i-only precompute: once per row block, reused for every j tile ----
    @pl.when(j == 0)
    def _init():
        out_ref[...] = jnp.zeros_like(out_ref)
        fs = fs_ref[...].astype(jnp.float32)
        lv = lv_ref[...].astype(jnp.float32)
        denom = 2.0 * jnp.exp(lv) + 1e-12
        inv = pl.reciprocal(denom, approx=True)          # EUP slot
        inv = inv * (2.0 - denom * inv)                  # one NR step -> ~exact
        lhs_ref[:, :d_full] = inv
        lhs_ref[:, d_full:] = -2.0 * fs * inv
        arow_ref[...] = (fs * fs * inv + 0.5 * lv).sum(axis=-1, keepdims=True)

    # ---- S[i,j] = sum_d x  on the (otherwise idle) MXU --------------------
    #   S = A[i] + [inv, -2*fs*inv] @ [ft^2, ft]^T   (single 2*D-deep dot)
    ft_full = ft_ref[...].astype(jnp.float32)
    rhs = jnp.concatenate([ft_full * ft_full, ft_full], axis=1)    # (TN, 2D)
    s_total = jax.lax.dot_general(
        lhs_ref[...], rhs, (((1,), (1,)), ((), ())),
        preferred_element_type=jnp.float32) + arow_ref[...]        # (TM, TN)

    # ---- single remaining 3-D elementwise pass: sum_d relu(+x) ------------
    def chunk_term(idx, acc):
        fs_c = fs_ref[:, idx].astype(cdt)                          # (TM, TD)
        ft_c = ft_ref[:, idx].astype(cdt)                          # (TN, TD)
        inv_c = lhs_ref[:, idx].astype(cdt)                        # (TM, TD)
        hlv_c = (0.5 * lv_ref[:, idx].astype(jnp.float32)).astype(cdt)
        diff = fs_c[:, None, :] - ft_c[None, :, :]                 # (TM,TN,TD)
        x = diff * diff * inv_c[:, None, :] + hlv_c[:, None, :]
        return acc + jnp.maximum(x, 0).sum(axis=-1, dtype=jnp.float32)

    zero = jnp.zeros((tm, tn), jnp.float32)
    if n_chunks <= 2 or td % 128 != 0:
        # few chunks (or odd td): static unroll with static slices
        term_pos = zero
        for c in range(n_chunks):
            term_pos = chunk_term(slice(c * td, (c + 1) * td), term_pos)
    else:
        # many chunks: bounded live range / tight steady-state loop
        def body(c, acc):
            start = pl.multiple_of(c * td, td)
            return chunk_term(pl.ds(start, td), acc)
        term_pos = jax.lax.fori_loop(0, n_chunks, body, zero)

    # relu(x) - relu(-x) == x  =>  sum_d relu(-x) = term_pos - S  (>= 0)
    term_neg = jnp.maximum(term_pos - s_total, 0.0)

    out_ref[...] += term_pos * wp_ref[...] + term_neg * wn_ref[...]


def _pick_tile(dim, cap, mult=1):
    """Largest divisor of `dim` that is <= cap and a multiple of `mult`;
    falls back to the full extent (always a legal block) if none exists."""
    if dim <= cap:
        return dim
    for t in range(cap, 0, -1):
        if dim % t == 0 and t % mult == 0:
            return t
    return dim


def uncl_forward(fm_s, fm_t, logvar_s, targets, fusion_true, multi_index=None,
                 *, tm=None, tn=None, td=None, compute_dtype=jnp.float32,
                 vmem_limit_bytes=None):
    """Pallas implementation of UNCL.forward."""
    M, D = fm_s.shape
    N, Dt = fm_t.shape
    assert D == Dt and logvar_s.shape == (M, D)

    # --- generation-aware defaults -----------------------------------------
    try:
        dev_kind = jax.devices()[0].device_kind.lower()
    except Exception:  # pragma: no cover
        dev_kind = ""
    is_v7 = ("v7" in dev_kind) or ("7x" in dev_kind)

    try:
        vmem_cap = pltpu.get_tpu_info().vmem_capacity_bytes
    except Exception:  # pragma: no cover
        vmem_cap = None

    if vmem_limit_bytes is None:
        if vmem_cap is not None:
            vmem_limit_bytes = int(vmem_cap * 3 // 4)   # 96 MiB v5e/v6e, 48 MiB v7x
        else:
            vmem_limit_bytes = 64 << 20

    if tm is None:
        # v7x has 2 TensorCores: keep >= 2 blocks on the "parallel" axis.
        tm = _pick_tile(M, 64 if is_v7 else 128, mult=8)
    if tn is None:
        tn = _pick_tile(N, 128, mult=128)               # lane-dense or full N
    if td is None:
        td = _pick_tile(D, 128)                         # bounded 3-D footprint
    # TODO(synk): for very large D (>= 4096) move the feature axis into the
    # grid (third "arbitrary" dim with scratch accumulators) so fs/lv/ft are
    # not staged as full-D double-buffered blocks.
    assert M % tm == 0 and N % tn == 0 and D % td == 0
    assert tm == M or tm % 8 == 0
    assert tn == N or tn % 128 == 0

    # --- mask / normalized weights depend only on the labels ----------------
    # (exact integer comparison; same 0/0 -> NaN semantics as the reference)
    targets_s = targets[multi_index] if fusion_true else targets
    mask = (targets_s[:, None] == targets[None, :]).astype(jnp.float32)  # (M,N)
    pos_cnt = mask.sum(axis=-1, keepdims=True)
    neg_cnt = (1.0 - mask).sum(axis=-1, keepdims=True)
    w_pos = mask / pos_cnt
    w_neg = (1.0 - mask) / neg_cnt

    out = pl.pallas_call(
        functools.partial(_uncl_kernel, td=td, compute_dtype=compute_dtype),
        out_shape=jax.ShapeDtypeStruct((M, tn), jnp.float32),
        grid_spec=pltpu.PrefetchScalarGridSpec(
            num_scalar_prefetch=0,
            grid=(M // tm, N // tn),
            in_specs=[
                pl.BlockSpec((tm, D), lambda i, j: (i, 0)),    # fm_s rows
                pl.BlockSpec((tm, D), lambda i, j: (i, 0)),    # logvar_s rows
                pl.BlockSpec((tn, D), lambda i, j: (j, 0)),    # fm_t tile
                pl.BlockSpec((tm, tn), lambda i, j: (i, j)),   # w_pos tile
                pl.BlockSpec((tm, tn), lambda i, j: (i, j)),   # w_neg tile
            ],
            out_specs=pl.BlockSpec((tm, tn), lambda i, j: (i, 0)),
            scratch_shapes=[
                pltpu.VMEM((tm, 2 * D), jnp.float32),          # [inv, -2*fs*inv]
                pltpu.VMEM((tm, 1), jnp.float32),              # A[i]
            ],
        ),
        compiler_params=pltpu.CompilerParams(
            dimension_semantics=("parallel", "arbitrary"),
            vmem_limit_bytes=vmem_limit_bytes,
        ),
    )(fm_s, logvar_s, fm_t, w_pos, w_neg)

    row_loss = out.sum(axis=-1)      # (M,) == sum_j (loss_pos + loss_neg)
    if fusion_true:
        return 7.0 * jnp.sum(row_loss) / N
    else:
        return jnp.mean(row_loss)


def uncl_reference(fm_s, fm_t, logvar_s, targets, fusion_true, multi_index=None):
    """Pure-JAX transcription of the PyTorch forward, for verification."""
    if fusion_true:
        mask = targets[multi_index][:, None] - targets[None, :]
    else:
        mask = targets[:, None] - targets[None, :]
    self_mask_pos = 1.0 - (mask != 0).astype(jnp.float32)

    diff = fm_s[:, None, :] - fm_t[None, :, :]
    quad = diff ** 2 / (2.0 * jnp.exp(logvar_s)[:, None, :] + 1e-12)
    half_lv = 0.5 * logvar_s[:, None, :]

    loss_pos = (jax.nn.relu(quad + half_lv).sum(-1) * self_mask_pos
                / self_mask_pos.sum(-1)[:, None])
    loss_neg = (jax.nn.relu(-quad - half_lv).sum(-1) * (1.0 - self_mask_pos)
                / (1.0 - self_mask_pos).sum(-1)[:, None])

    if fusion_true:
        n = fm_t.shape[0]
        return 7.0 * loss_pos.sum(-1).sum() / n + 7.0 * loss_neg.sum(-1).sum() / n
    else:
        return loss_pos.sum(-1).mean() + loss_neg.sum(-1).mean()


if __name__ == "__main__":
    key = jax.random.PRNGKey(0)
    k1, k2, k3, k4 = jax.random.split(key, 4)

    M = N = 16           # student/teacher batch
    D = 128              # feature dim (lane axis)
    fm_s = jax.random.normal(k1, (M, D), dtype=jnp.float32)
    fm_t = jax.random.normal(k2, (N, D), dtype=jnp.float32)
    logvar_s = 0.1 * jax.random.normal(k3, (M, D), dtype=jnp.float32)
    # Structured labels so every row has >=1 same-class and >=1 diff-class
    # teacher (matches the reference's div-by-zero-free regime).
    targets = (jnp.arange(N) % 4).astype(jnp.int32)
    multi_index = jax.random.randint(k4, (M,), 0, N, dtype=jnp.int32)

    # Non-fusion path.
    out = uncl_forward(fm_s, fm_t, logvar_s, targets, fusion_true=False)
    jax.block_until_ready(out)
    ref = uncl_reference(fm_s, fm_t, logvar_s, targets, fusion_true=False)
    assert jnp.allclose(out, ref, rtol=2e-3, atol=2e-3), (out, ref)

    # Fusion path (student labels gathered via multi_index for the mask).
    out_f = uncl_forward(fm_s, fm_t, logvar_s, targets, fusion_true=True,
                         multi_index=multi_index)
    jax.block_until_ready(out_f)
    ref_f = uncl_reference(fm_s, fm_t, logvar_s, targets, fusion_true=True,
                           multi_index=multi_index)
    assert jnp.allclose(out_f, ref_f, rtol=2e-3, atol=2e-3), (out_f, ref_f)

    print("KERNEL_OK")
</pallas_src>

<mosaic_0001>
module attributes {stable_mosaic.version = 11 : i64} {
  func.func @_uncl_kernel(%arg0: i32, %arg1: i32, %arg2: memref<16x128xf32, #tpu.memory_space<vmem>>, %arg3: memref<16x128xf32, #tpu.memory_space<vmem>>, %arg4: memref<16x128xf32, #tpu.memory_space<vmem>>, %arg5: memref<16x16xf32, #tpu.memory_space<vmem>>, %arg6: memref<16x16xf32, #tpu.memory_space<vmem>>, %arg7: memref<16x16xf32, #tpu.memory_space<vmem>>, %arg8: memref<16x256xf32, #tpu.memory_space<vmem>>, %arg9: memref<16x1xf32, #tpu.memory_space<vmem>>) attributes {dimension_semantics = [#tpu.dimension_semantics<parallel>, #tpu.dimension_semantics<arbitrary>], iteration_bounds = array<i64: 1, 1>, scalar_prefetch = 0 : i64, scratch_operands = 2 : i64, tpu.core_type = #tpu.core_type<tc>, window_params = [{transform_indices = @transform_0, window_bounds = array<i64: 16, 128>}, {transform_indices = @transform_1, window_bounds = array<i64: 16, 128>}, {transform_indices = @transform_2, window_bounds = array<i64: 16, 128>}, {transform_indices = @transform_3, window_bounds = array<i64: 16, 16>}, {transform_indices = @transform_4, window_bounds = array<i64: 16, 16>}, {transform_indices = @transform_5, window_bounds = array<i64: 16, 16>}]} {
    %c0_i32 = arith.constant 0 : i32
    %0 = arith.cmpi eq, %arg1, %c0_i32 : i32
    %1 = arith.extui %0 : i1 to i32
    %c0_i32_0 = arith.constant 0 : i32
    %2 = arith.cmpi ne, %1, %c0_i32_0 : i32
    scf.if %2 {
      %cst_27 = arith.constant 0.000000e+00 : f32
      %45 = vector.broadcast %cst_27 : f32 to vector<16x16xf32>
      %c0_28 = arith.constant 0 : index
      %c0_29 = arith.constant 0 : index
      %46 = vector.load %arg7[%c0_28, %c0_29] : memref<16x16xf32, #tpu.memory_space<vmem>>, vector<16x16xf32>
      tpu.vector_store %arg7[%c0_28, %c0_29], %45 {strides = array<i32>} : memref<16x16xf32, #tpu.memory_space<vmem>>, vector<16x16xf32>,
      %c0_30 = arith.constant 0 : index
      %c0_31 = arith.constant 0 : index
      %47 = vector.load %arg2[%c0_30, %c0_31] : memref<16x128xf32, #tpu.memory_space<vmem>>, vector<16x128xf32>
      %c0_32 = arith.constant 0 : index
      %c0_33 = arith.constant 0 : index
      %48 = vector.load %arg3[%c0_32, %c0_33] : memref<16x128xf32, #tpu.memory_space<vmem>>, vector<16x128xf32>
      %49 = math.exp %48 : vector<16x128xf32>
      %cst_34 = arith.constant 2.000000e+00 : f32
      %50 = vector.broadcast %cst_34 : f32 to vector<16x128xf32>
      %51 = arith.mulf %50, %49 : vector<16x128xf32>
      %cst_35 = arith.constant 9.99999996E-13 : f32
      %52 = vector.broadcast %cst_35 : f32 to vector<16x128xf32>
      %53 = arith.addf %51, %52 : vector<16x128xf32>
      %54 = tpu.reciprocal %53 {approx = true} : vector<16x128xf32> -> vector<16x128xf32>
      %55 = arith.mulf %53, %54 : vector<16x128xf32>
      %cst_36 = arith.constant 2.000000e+00 : f32
      %56 = vector.broadcast %cst_36 : f32 to vector<16x128xf32>
      %57 = arith.subf %56, %55 : vector<16x128xf32>
      %58 = arith.mulf %54, %57 : vector<16x128xf32>
      %c0_37 = arith.constant 0 : index
      %c0_38 = arith.constant 0 : index
      %59 = vector.load %arg8[%c0_37, %c0_38] : memref<16x256xf32, #tpu.memory_space<vmem>>, vector<16x128xf32>
      tpu.vector_store %arg8[%c0_37, %c0_38], %58 {strides = array<i32>} : memref<16x256xf32, #tpu.memory_space<vmem>>, vector<16x128xf32>,
      %cst_39 = arith.constant -2.000000e+00 : f32
      %60 = vector.broadcast %cst_39 : f32 to vector<16x128xf32>
      %61 = arith.mulf %60, %47 : vector<16x128xf32>
      %62 = arith.mulf %61, %58 : vector<16x128xf32>
      %c0_40 = arith.constant 0 : index
      %c128 = arith.constant 128 : index
      %63 = vector.load %arg8[%c0_40, %c128] : memref<16x256xf32, #tpu.memory_space<vmem>>, vector<16x128xf32>
      tpu.vector_store %arg8[%c0_40, %c128], %62 {strides = array<i32>} : memref<16x256xf32, #tpu.memory_space<vmem>>, vector<16x128xf32>,
      %64 = arith.mulf %47, %47 : vector<16x128xf32>
      %65 = arith.mulf %64, %58 : vector<16x128xf32>
      %cst_41 = arith.constant 5.000000e-01 : f32
      %66 = vector.broadcast %cst_41 : f32 to vector<16x128xf32>
      %67 = arith.mulf %66, %48 : vector<16x128xf32>
      %68 = arith.addf %65, %67 : vector<16x128xf32>
      %cst_42 = arith.constant dense<0.000000e+00> : vector<16xf32>
      %69 = vector.multi_reduction <add>, %68, %cst_42 [1] : vector<16x128xf32> to vector<16xf32>
      %70 = vector.shape_cast %69 : vector<16xf32> to vector<16x1xf32>
      %c0_43 = arith.constant 0 : index
      %c0_44 = arith.constant 0 : index
      %71 = vector.load %arg9[%c0_43, %c0_44] : memref<16x1xf32, #tpu.memory_space<vmem>>, vector<16x1xf32>
      tpu.vector_store %arg9[%c0_43, %c0_44], %70 {strides = array<i32>} : memref<16x1xf32, #tpu.memory_space<vmem>>, vector<16x1xf32>,
    } else {
    }
    %c0 = arith.constant 0 : index
    %c0_1 = arith.constant 0 : index
    %3 = vector.load %arg4[%c0, %c0_1] : memref<16x128xf32, #tpu.memory_space<vmem>>, vector<16x128xf32>
    %4 = arith.mulf %3, %3 : vector<16x128xf32>
    %5 = tpu.concatenate %4, %3 in 1 : vector<16x128xf32>, vector<16x128xf32> -> vector<16x256xf32>
    %c0_2 = arith.constant 0 : index
    %c0_3 = arith.constant 0 : index
    %6 = vector.load %arg8[%c0_2, %c0_3] : memref<16x256xf32, #tpu.memory_space<vmem>>, vector<16x256xf32>
    %cst = arith.constant dense<0.000000e+00> : vector<16x16xf32>
    %7 = tpu.matmul %6, %5, %cst {dimension_numbers = #tpu.dot_dimension_numbers<[1], [1], [0], [0], [0, 0, 1, 0], [], []>} : vector<16x256xf32>, vector<16x256xf32>, vector<16x16xf32> -> vector<16x16xf32>
    %c0_4 = arith.constant 0 : index
    %c0_5 = arith.constant 0 : index
    %8 = vector.load %arg9[%c0_4, %c0_5] : memref<16x1xf32, #tpu.memory_space<vmem>>, vector<16x1xf32>
    %9 = vector.broadcast %8 : vector<16x1xf32> to vector<16x16xf32>
    %10 = arith.addf %7, %9 : vector<16x16xf32>
    %cst_6 = arith.constant 0.000000e+00 : f32
    %11 = vector.broadcast %cst_6 : f32 to vector<16x16xf32>
    %c0_7 = arith.constant 0 : index
    %c0_8 = arith.constant 0 : index
    %12 = vector.load %arg2[%c0_7, %c0_8] : memref<16x128xf32, #tpu.memory_space<vmem>>, vector<16x128xf32>
    %c0_9 = arith.constant 0 : index
    %c0_10 = arith.constant 0 : index
    %13 = vector.load %arg4[%c0_9, %c0_10] : memref<16x128xf32, #tpu.memory_space<vmem>>, vector<16x128xf32>
    %c0_11 = arith.constant 0 : index
    %c0_12 = arith.constant 0 : index
    %14 = vector.load %arg8[%c0_11, %c0_12] : memref<16x256xf32, #tpu.memory_space<vmem>>, vector<16x128xf32>
    %c0_13 = arith.constant 0 : index
    %c0_14 = arith.constant 0 : index
    %15 = vector.load %arg3[%c0_13, %c0_14] : memref<16x128xf32, #tpu.memory_space<vmem>>, vector<16x128xf32>
    %cst_15 = arith.constant 5.000000e-01 : f32
    %16 = vector.broadcast %cst_15 : f32 to vector<16x128xf32>
    %17 = arith.mulf %16, %15 : vector<16x128xf32>
    %18 = vector.shape_cast %12 : vector<16x128xf32> to vector<16x1x128xf32>
    %19 = vector.shape_cast %13 : vector<16x128xf32> to vector<1x16x128xf32>
    %20 = vector.broadcast %18 : vector<16x1x128xf32> to vector<16x16x128xf32>
    %21 = vector.broadcast %19 : vector<1x16x128xf32> to vector<16x16x128xf32>
    %22 = arith.subf %20, %21 : vector<16x16x128xf32>
    %23 = arith.mulf %22, %22 : vector<16x16x128xf32>
    %24 = vector.shape_cast %14 : vector<16x128xf32> to vector<16x1x128xf32>
    %25 = vector.broadcast %24 : vector<16x1x128xf32> to vector<16x16x128xf32>
    %26 = arith.mulf %23, %25 : vector<16x16x128xf32>
    %27 = vector.shape_cast %17 : vector<16x128xf32> to vector<16x1x128xf32>
    %28 = vector.broadcast %27 : vector<16x1x128xf32> to vector<16x16x128xf32>
    %29 = arith.addf %26, %28 : vector<16x16x128xf32>
    %cst_16 = arith.constant 0.000000e+00 : f32
    %30 = vector.broadcast %cst_16 : f32 to vector<16x16x128xf32>
    %31 = arith.maximumf %29, %30 : vector<16x16x128xf32>
    %cst_17 = arith.constant dense<0.000000e+00> : vector<16x16xf32>
    %32 = vector.multi_reduction <add>, %31, %cst_17 [2] : vector<16x16x128xf32> to vector<16x16xf32>
    %33 = arith.addf %11, %32 : vector<16x16xf32>
    %34 = arith.subf %33, %10 : vector<16x16xf32>
    %cst_18 = arith.constant 0.000000e+00 : f32
    %35 = vector.broadcast %cst_18 : f32 to vector<16x16xf32>
    %36 = arith.maximumf %34, %35 : vector<16x16xf32>
    %c0_19 = arith.constant 0 : index
    %c0_20 = arith.constant 0 : index
    %37 = vector.load %arg7[%c0_19, %c0_20] : memref<16x16xf32, #tpu.memory_space<vmem>>, vector<16x16xf32>
    %c0_21 = arith.constant 0 : index
    %c0_22 = arith.constant 0 : index
    %38 = vector.load %arg5[%c0_21, %c0_22] : memref<16x16xf32, #tpu.memory_space<vmem>>, vector<16x16xf32>
    %39 = arith.mulf %33, %38 : vector<16x16xf32>
    %c0_23 = arith.constant 0 : index
    %c0_24 = arith.constant 0 : index
    %40 = vector.load %arg6[%c0_23, %c0_24] : memref<16x16xf32, #tpu.memory_space<vmem>>, vector<16x16xf32>
    %41 = arith.mulf %36, %40 : vector<16x16xf32>
    %42 = arith.addf %39, %41 : vector<16x16xf32>
    %43 = arith.addf %37, %42 : vector<16x16xf32>
    %c0_25 = arith.constant 0 : index
    %c0_26 = arith.constant 0 : index
    %44 = vector.load %arg7[%c0_25, %c0_26] : memref<16x16xf32, #tpu.memory_space<vmem>>, vector<16x16xf32>
    tpu.vector_store %arg7[%c0_25, %c0_26], %43 {strides = array<i32>} : memref<16x16xf32, #tpu.memory_space<vmem>>, vector<16x16xf32>,
    return
  }
  func.func @transform_0(%arg0: i32, %arg1: i32) -> (i32, i32) {
    %c0_i32 = arith.constant 0 : i32
    %c0_i32_0 = arith.constant 0 : i32
    return %arg0, %c0_i32 : i32, i32
  }
  func.func @transform_1(%arg0: i32, %arg1: i32) -> (i32, i32) {
    %c0_i32 = arith.constant 0 : i32
    %c0_i32_0 = arith.constant 0 : i32
    return %arg0, %c0_i32 : i32, i32
  }
  func.func @transform_2(%arg0: i32, %arg1: i32) -> (i32, i32) {
    %c0_i32 = arith.constant 0 : i32
    %c0_i32_0 = arith.constant 0 : i32
    return %arg1, %c0_i32 : i32, i32
  }
  func.func @transform_3(%arg0: i32, %arg1: i32) -> (i32, i32) {
    %c0_i32 = arith.constant 0 : i32
    return %arg0, %arg1 : i32, i32
  }
  func.func @transform_4(%arg0: i32, %arg1: i32) -> (i32, i32) {
    %c0_i32 = arith.constant 0 : i32
    return %arg0, %arg1 : i32, i32
  }
  func.func @transform_5(%arg0: i32, %arg1: i32) -> (i32, i32) {
    %c0_i32 = arith.constant 0 : i32
    %c0_i32_0 = arith.constant 0 : i32
    return %arg0, %c0_i32 : i32, i32
  }
}

</mosaic_0001>

<llo_original>
// kernel: tpu_custom_call.1
$region0: #{tpu_custom_call.1}
  #allocation0 [shape = 'u32[]', space=smem, size = 0x4, offset = 0x4, fixed_abs, tag = 'smem constant byte address 0x4 - core index']
  #allocation1 [shape = 'u32[144,128]{1,0:T(1,128)}', space=vmem, size = 0x12000, scoped, tag = 'internal scratch']
  #allocation2 [shape = 'f32[16,256]{1,0:T(8,128)}', space=vmem, size = 0x4000, scoped, tag = 'scratch operand']
  #allocation3 [shape = 'f32[16,1]{1,0:T(8,128)}', space=vmem, size = 0x2000, scoped, tag = 'scratch operand']
  %s0 = inlined_call_operand.hbm [shape: f32[16,128], index: 0, kind: input, shape index: {}]
  %s1 = inlined_call_operand.hbm [shape: f32[16,128], index: 1, kind: input, shape index: {}]
  %s2 = inlined_call_operand.hbm [shape: f32[16,128], index: 2, kind: input, shape index: {}]
  %s3 = inlined_call_operand.hbm [shape: f32[16,16], index: 3, kind: input, shape index: {}]
  %s4 = inlined_call_operand.hbm [shape: f32[16,16], index: 4, kind: input, shape index: {}]
  %s5 = inlined_call_operand.hbm [shape: f32[16,16], index: 5, kind: output, shape index: {}]
  %s6 = sld [smem:[#allocation0]]
  $region54: #{tpu_custom_call.1} parent=0
    _
  %s8 = ssub.s32 1, %s6
  %s9 = scalar_select 0, %s8, %s6
  $region1: #{tpu_custom_call.1} parent=0
    #allocation4 [shape = 'u8[8192]{0}', space=vmem, size = 0x2000, scoped, tag = 'input window, operand 0, single buffered']
    #allocation5 [shape = 's32[1]{0}', space=sflag, size = 0x4, scoped, tag = 'scoped memory for tpu_custom_call.1']
    #allocation6 [shape = 's32[1]{0}', space=sflag, size = 0x4, scoped, tag = 'scoped memory for tpu_custom_call.1']
    #allocation7 [shape = 'u8[8192]{0}', space=vmem, size = 0x2000, scoped, tag = 'input window, operand 1, single buffered']
    #allocation8 [shape = 's32[1]{0}', space=sflag, size = 0x4, scoped, tag = 'scoped memory for tpu_custom_call.1']
    #allocation9 [shape = 'u8[8192]{0}', space=vmem, size = 0x2000, scoped, tag = 'input window, operand 2, single buffered']
    #allocation10 [shape = 'u8[8192]{0}', space=vmem, size = 0x2000, scoped, tag = 'input window, operand 3, single buffered']
    #allocation11 [shape = 's32[1]{0}', space=sflag, size = 0x4, scoped, tag = 'scoped memory for tpu_custom_call.1']
    #allocation12 [shape = 'u8[8192]{0}', space=vmem, size = 0x2000, scoped, tag = 'input window, operand 4, single buffered']
    #allocation13 [shape = 'u8[8192]{0}', space=vmem, size = 0x2000, scoped, tag = 'output window, operand 0, single buffered']
    %10 = vsyncpa [#allocation5], 0
    %11 = vsyncpa [#allocation8], 0
    %12 = vsyncpa [#allocation11], 0
    %13 = vsyncpa [#allocation6], 0
    // Predicated region
    $region2: #{tpu_custom_call.1} parent=1 // pred_check
      _
    $region3: #{tpu_custom_call.1} parent=1 // pred_check_branch
      %15 = sbr.rel (0) target = $region5
    $region4: #{tpu_custom_call.1} parent=1 // pred_region
      %s17 = ssub.s32 256, 256
      %18 = vsyncadd [#allocation5], %s17
      %s19 = sshll.u32 [#allocation4], 4
      %s20 = int_to_ptr.vmem [resolvable:$true] %s19
      %25 = dma.hbm_to_vmem [thread:$0]  %s0, 256, %s20, [#allocation5], 128, 128, 8
    $region5: #{tpu_custom_call.1} parent=1 // pred_fallthru
      _
    // Predicated region
    $region6: #{tpu_custom_call.1} parent=1 // pred_check
      _
    $region7: #{tpu_custom_call.1} parent=1 // pred_check_branch
      %27 = sbr.rel (0) target = $region9
    $region8: #{tpu_custom_call.1} parent=1 // pred_region
      %s29 = ssub.s32 256, 256
      %30 = vsyncadd [#allocation8], %s29
      %s31 = sshll.u32 [#allocation7], 4
      %s32 = int_to_ptr.vmem [resolvable:$true] %s31
      %37 = dma.hbm_to_vmem [thread:$0]  %s1, 256, %s32, [#allocation8], 128, 128, 8
    $region9: #{tpu_custom_call.1} parent=1 // pred_fallthru
      _
    // Predicated region
    $region10: #{tpu_custom_call.1} parent=1 // pred_check
      _
    $region11: #{tpu_custom_call.1} parent=1 // pred_check_branch
      %39 = sbr.rel (0) target = $region13
    $region12: #{tpu_custom_call.1} parent=1 // pred_region
      %s41 = ssub.s32 256, 256
      %42 = vsyncadd [#allocation8], %s41
      %s43 = sshll.u32 [#allocation9], 4
      %s44 = int_to_ptr.vmem [resolvable:$true] %s43
      %49 = dma.hbm_to_vmem [thread:$0]  %s2, 256, %s44, [#allocation8], 128, 128, 8
    $region13: #{tpu_custom_call.1} parent=1 // pred_fallthru
      _
    // Predicated region
    $region14: #{tpu_custom_call.1} parent=1 // pred_check
      _
    $region15: #{tpu_custom_call.1} parent=1 // pred_check_branch
      %51 = sbr.rel (0) target = $region17
    $region16: #{tpu_custom_call.1} parent=1 // pred_region
      %s53 = ssub.s32 256, 256
      %54 = vsyncadd [#allocation11], %s53
      %s55 = sshll.u32 [#allocation10], 4
      %s56 = int_to_ptr.vmem [resolvable:$true] %s55
      %61 = dma.hbm_to_vmem [thread:$0]  %s3, 256, %s56, [#allocation11], 128, 128, 8
    $region17: #{tpu_custom_call.1} parent=1 // pred_fallthru
      _
    // Predicated region
    $region18: #{tpu_custom_call.1} parent=1 // pred_check
      _
    $region19: #{tpu_custom_call.1} parent=1 // pred_check_branch
      %63 = sbr.rel (0) target = $region21
    $region20: #{tpu_custom_call.1} parent=1 // pred_region
      %s65 = ssub.s32 256, 256
      %66 = vsyncadd [#allocation11], %s65
      %s67 = sshll.u32 [#allocation12], 4
      %s68 = int_to_ptr.vmem [resolvable:$true] %s67
      %73 = dma.hbm_to_vmem [thread:$0]  %s4, 256, %s68, [#allocation11], 128, 128, 8
    $region21: #{tpu_custom_call.1} parent=1 // pred_fallthru
      _
    // Predicated region
    $region22: #{tpu_custom_call.1} parent=1 // pred_check
      _
    $region23: #{tpu_custom_call.1} parent=1 // pred_check_branch
      %75 = sbr.rel (0) target = $region25
    $region24: #{tpu_custom_call.1} parent=1 // pred_region
      %76 = dma.done [#allocation5], 256
    $region25: #{tpu_custom_call.1} parent=1 // pred_fallthru
      _
    // Predicated region
    $region26: #{tpu_custom_call.1} parent=1 // pred_check
      _
    $region27: #{tpu_custom_call.1} parent=1 // pred_check_branch
      %78 = sbr.rel (0) target = $region29
    $region28: #{tpu_custom_call.1} parent=1 // pred_region
      %79 = dma.done [#allocation8], 256
    $region29: #{tpu_custom_call.1} parent=1 // pred_fallthru
      _
    // Predicated region
    $region30: #{tpu_custom_call.1} parent=1 // pred_check
      _
    $region31: #{tpu_custom_call.1} parent=1 // pred_check_branch
      %81 = sbr.rel (0) target = $region33
    $region32: #{tpu_custom_call.1} parent=1 // pred_region
      %82 = dma.done [#allocation8], 256
    $region33: #{tpu_custom_call.1} parent=1 // pred_fallthru
      _
    // Predicated region
    $region34: #{tpu_custom_call.1} parent=1 // pred_check
      _
    $region35: #{tpu_custom_call.1} parent=1 // pred_check_branch
      %84 = sbr.rel (0) target = $region37
    $region36: #{tpu_custom_call.1} parent=1 // pred_region
      %85 = dma.done [#allocation11], 256
    $region37: #{tpu_custom_call.1} parent=1 // pred_fallthru
      _
    // Predicated region
    $region38: #{tpu_custom_call.1} parent=1 // pred_check
      _
    $region39: #{tpu_custom_call.1} parent=1 // pred_check_branch
      %87 = sbr.rel (0) target = $region41
    $region40: #{tpu_custom_call.1} parent=1 // pred_region
      %88 = dma.done [#allocation11], 256
    $region41: #{tpu_custom_call.1} parent=1 // pred_fallthru
      _
    %p89 = scmp.eq.s32.totalorder 0, 0
    // Predicated region
    $region42: #{tpu_custom_call.1} parent=1 // pred_check
      %p90 = pneg %p89
    $region43: #{tpu_custom_call.1} parent=1 // pred_check_branch
      %92 = sbr.rel (%p90) target = $region45
    $region44: #{tpu_custom_call.1} parent=1 // pred_region
      %vm93 = vcmask 130048
      %94 = vst.msk [vmem:[#allocation13] sm:$0xff] %vm93, 0.0
      %95 = vst.msk [vmem:[#allocation13 + $0x8] sm:$0xff] %vm93, 0.0
      %v96 = vld [vmem:[#allocation4] sm:$0xff]
      %v97 = vld [vmem:[#allocation4 + $0x8] sm:$0xff]
      %v98 = vld [vmem:[#allocation7] sm:$0xff]
      %v99 = vld [vmem:[#allocation7 + $0x8] sm:$0xff]
      %v100 = vmul.f32 %v98, 1.442695
      %v101 = vpow.pop %v100
      %v102 = vmul.f32 %v99, 1.442695
      %v103 = vpow.pop %v102
      %v104 = vmul.f32 %v101, 2.0
      %v105 = vmul.f32 %v103, 2.0
      %v106 = vadd.f32 %v104, 1e-12
      %v107 = vadd.f32 %v105, 1e-12
      %v108 = vrcp.pop %v106
      %v109 = vrcp.pop %v107
      %v110 = vmul.f32 %v106, %v108
      %v111 = vmul.f32 %v107, %v109
      %v112 = vsub.f32 2.0, %v110
      %v113 = vsub.f32 2.0, %v111
      %v114 = vmul.f32 %v108, %v112
      %v115 = vmul.f32 %v109, %v113
      %116 = vst [vmem:[#allocation2] sm:$0xff] %v114
      %117 = vst [vmem:[#allocation2 + $0x10] sm:$0xff] %v115
      %v118 = vmul.f32 %v96, -2.0
      %v119 = vmul.f32 %v97, -2.0
      %v120 = vmul.f32 %v118, %v114
      %v121 = vmul.f32 %v119, %v115
      %122 = vst [vmem:[#allocation2 + $0x8] sm:$0xff] %v120
      %123 = vst [vmem:[#allocation2 + $0x18] sm:$0xff] %v121
      %v124 = vmul.f32 %v96, %v96
      %v125 = vmul.f32 %v97, %v97
      %v126 = vmul.f32 %v124, %v114
      %v127 = vmul.f32 %v125, %v115
      %v128 = vmul.f32 %v98, 0.5
      %v129 = vmul.f32 %v99, 0.5
      %v130 = vadd.f32 %v126, %v128
      %v131 = vadd.f32 %v127, %v129
      %132 = vadd.xlane.f32.xlu0 %v130
      %v133 = vpop.xlane.xlu0 %132
      %134 = vadd.xlane.f32.xlu0 %v131
      %v135 = vpop.xlane.xlu0 %134
      %vm136 = vcmask 7168
      %137 = vst.msk [vmem:[#allocation3] sm:$0xff] %vm136, %v133
      %138 = vst.msk [vmem:[#allocation3 + $0x8] sm:$0xff] %vm136, %v135
    $region45: #{tpu_custom_call.1} parent=1 // pred_fallthru
      _
    %v139 = vld [vmem:[#allocation9] sm:$0xff]
    %v140 = vld [vmem:[#allocation9 + $0x8] sm:$0xff]
    %v141 = vmul.f32 %v139, %v139
    %v142 = vmul.f32 %v140, %v140
    %v143 = vld [vmem:[#allocation2] sm:$0xff]
    %v144 = vld [vmem:[#allocation2 + $0x8] sm:$0xff]
    %v145 = vld [vmem:[#allocation2 + $0x10] sm:$0xff]
    %v146 = vld [vmem:[#allocation2 + $0x18] sm:$0xff]
    %v147 = vld [vmem:[#allocation3] sm:$0xff]
    %v148 = vld [vmem:[#allocation3 + $0x8] sm:$0xff]
    %150 = vset.pattern.permute.xlu0 0
    %151 = vperm.xlu0 %150, %v147
    %v152 = vpop.permute.xlu0 %151
    %155 = vset.pattern.permute.xlu0 0
    %156 = vperm.xlu0 %155, %v148
    %v157 = vpop.permute.xlu0 %156
    %159 = vmatprep.subr.mxu0 %v139
    %160 = vmatpush1.xpose.msra.mxu0 %v141
    %161 = vmatprep.subr.mxu0 %v140
    %162 = vmatpush1.xpose.msra.mxu0 %v142
    %163 = vmatprep.subr.mxu0 0.0
    %164 = vmatpush1.xpose.msra.mxu0 0.0
    %165 = vmatprep.subr.mxu0 0.0
    %166 = vmatpush1.xpose.msra.mxu0 0.0
    %167 = vmatprep.subr.mxu0 0.0
    %168 = vmatpush1.xpose.msra.mxu0 0.0
    %169 = vmatprep.subr.mxu0 0.0
    %170 = vmatpush1.xpose.msra.mxu0 0.0
    %171 = vmatprep.subr.mxu0 0.0
    %172 = vmatpush1.xpose.msra.mxu0 0.0
    %173 = vmatprep.subr.mxu0 0.0
    %174 = vmatpush1.xpose.msra.mxu0 0.0
    %175 = vmatprep.subr.mxu0 0.0
    %176 = vmatpush1.xpose.msra.mxu0 0.0
    %177 = vmatprep.subr.mxu0 0.0
    %178 = vmatpush1.xpose.msra.mxu0 0.0
    %179 = vmatprep.subr.mxu0 0.0
    %180 = vmatpush1.xpose.msra.mxu0 0.0
    %181 = vmatprep.subr.mxu0 0.0
    %182 = vmatpush1.xpose.msra.mxu0 0.0
    %183 = vmatprep.subr.mxu0 0.0
    %184 = vmatpush1.xpose.msra.mxu0 0.0
    %185 = vmatprep.subr.mxu0 0.0
    %186 = vmatpush1.xpose.msra.mxu0 0.0
    %187 = vmatprep.subr.mxu0 0.0
    %188 = vmatpush1.xpose.msra.mxu0 0.0
    %189 = vmatprep.subr.mxu0 0.0
    %190 = vmatpush1.xpose.msra.mxu0 0.0
    %191 = vmatprep.subr.mxu0 0.0
    %192 = vmatpush1.xpose.msra.mxu0 0.0
    %193 = vmatprep.subr.mxu0 0.0
    %194 = vmatpush1.xpose.msra.mxu0 0.0
    %195 = vmatprep.subr.mxu0 0.0
    %196 = vmatpush1.xpose.msra.mxu0 0.0
    %197 = vmatprep.subr.mxu0 0.0
    %198 = vmatpush1.xpose.msra.mxu0 0.0
    %199 = vmatprep.subr.mxu0 0.0
    %200 = vmatpush1.xpose.msra.mxu0 0.0
    %201 = vmatprep.subr.mxu0 0.0
    %202 = vmatpush1.xpose.msra.mxu0 0.0
    %203 = vmatprep.subr.mxu0 0.0
    %204 = vmatpush1.xpose.msra.mxu0 0.0
    %205 = vmatprep.subr.mxu0 0.0
    %206 = vmatpush1.xpose.msra.mxu0 0.0
    %207 = vmatprep.subr.mxu0 0.0
    %208 = vmatpush1.xpose.msra.mxu0 0.0
    %209 = vmatprep.subr.mxu0 0.0
    %210 = vmatpush1.xpose.msra.mxu0 0.0
    %211 = vmatprep.subr.mxu0 0.0
    %212 = vmatpush1.xpose.msra.mxu0 0.0
    %213 = vmatprep.subr.mxu0 0.0
    %214 = vmatpush1.xpose.msra.mxu0 0.0
    %215 = vmatprep.subr.mxu0 0.0
    %216 = vmatpush1.xpose.msra.mxu0 0.0
    %217 = vmatprep.subr.mxu0 0.0
    %218 = vmatpush1.xpose.msra.mxu0 0.0
    %219 = vmatprep.subr.mxu0 0.0
    %220 = vmatpush1.xpose.msra.mxu0 0.0
    %221 = vmatprep.subr.mxu0 0.0
    %222 = vmatpush1.xpose.msra.mxu0 0.0
    %223 = vmatprep.mubr.f32.mxu0 %v144
    %224 = vmatmul.mubr.f32.gmra.mrb[0].mxu0 %v143
    %v225 = vpop.f32.mrb[0].mxu0
    %v226 = vadd.f32 %v152, %v225
    %v227 = vpop.f32.mrb[0].mxu0
    %228 = vmatprep.mubr.f32.mxu0 %v146
    %229 = vmatmul.mubr.f32.gmra.mrb[0].mxu0 %v145
    %v230 = vpop.f32.mrb[0].mxu0
    %v231 = vadd.f32 %v157, %v230
    %v232 = vpop.f32.mrb[0].mxu0
    %233 = vdwg.mxu0
    %v234 = vld [vmem:[#allocation4] sm:$0xff]
    %v235 = vld [vmem:[#allocation4 + $0x8] sm:$0xff]
    %v236 = vld [vmem:[#allocation2] sm:$0xff]
    %v237 = vld [vmem:[#allocation2 + $0x10] sm:$0xff]
    %v238 = vld [vmem:[#allocation7] sm:$0xff]
    %v239 = vld [vmem:[#allocation7 + $0x8] sm:$0xff]
    %v240 = vmul.f32 %v238, 0.5
    %v241 = vmul.f32 %v239, 0.5
    %v244 = vcombine.high %v234, %v234
    %v246 = vunpack.c.l.s4 1966171168
    %v247 = vunpack.c.0.s8 %v246
    %v248 = vlaneseq
    %v249 = vshrl.u32 %v248, 7
    %v250 = vsub.s32 %v247, %v249
    %v251 = vrot.slane %v234, %v250
    %v253 = vunpack.c.l.s4 1966171168
    %v254 = vunpack.c.0.s8 %v253
    %v255 = vlaneseq
    %v256 = vshrl.u32 %v255, 7
    %v257 = vsub.s32 %v254, %v256
    %v258 = vrot.slane %v244, %v257
    %v259 = vcombine.high %v251, %v251
    %v260 = vcombine.high %v258, %v258
    %v262 = vunpack.c.l.s4 1966171168
    %v263 = vunpack.c.0.s8 %v262
    %v264 = vlaneseq
    %v265 = vshrl.u32 %v264, 7
    %v266 = vsub.s32 %v263, %v265
    %v267 = vrot.slane %v251, %v266
    %v269 = vunpack.c.l.s4 1966171168
    %v270 = vunpack.c.0.s8 %v269
    %v271 = vlaneseq
    %v272 = vshrl.u32 %v271, 7
    %v273 = vsub.s32 %v270, %v272
    %v274 = vrot.slane %v258, %v273
    %v276 = vunpack.c.l.s4 1966171168
    %v277 = vunpack.c.0.s8 %v276
    %v278 = vlaneseq
    %v279 = vshrl.u32 %v278, 7
    %v280 = vsub.s32 %v277, %v279
    %v281 = vrot.slane %v259, %v280
    %v283 = vunpack.c.l.s4 1966171168
    %v284 = vunpack.c.0.s8 %v283
    %v285 = vlaneseq
    %v286 = vshrl.u32 %v285, 7
    %v287 = vsub.s32 %v284, %v286
    %v288 = vrot.slane %v260, %v287
    %v289 = vcombine.high %v267, %v267
    %v290 = vcombine.high %v274, %v274
    %v291 = vcombine.high %v281, %v281
    %v292 = vcombine.high %v288, %v288
    %v293 = vcombine.high %v235, %v235
    %v295 = vunpack.c.l.s4 1966171168
    %v296 = vunpack.c.0.s8 %v295
    %v297 = vlaneseq
    %v298 = vshrl.u32 %v297, 7
    %v299 = vsub.s32 %v296, %v298
    %v300 = vrot.slane %v235, %v299
    %v302 = vunpack.c.l.s4 1966171168
    %v303 = vunpack.c.0.s8 %v302
    %v304 = vlaneseq
    %v305 = vshrl.u32 %v304, 7
    %v306 = vsub.s32 %v303, %v305
    %v307 = vrot.slane %v293, %v306
    %v308 = vcombine.high %v300, %v300
    %v309 = vcombine.high %v307, %v307
    %v311 = vunpack.c.l.s4 1966171168
    %v312 = vunpack.c.0.s8 %v311
    %v313 = vlaneseq
    %v314 = vshrl.u32 %v313, 7
    %v315 = vsub.s32 %v312, %v314
    %v316 = vrot.slane %v300, %v315
    %v318 = vunpack.c.l.s4 1966171168
    %v319 = vunpack.c.0.s8 %v318
    %v320 = vlaneseq
    %v321 = vshrl.u32 %v320, 7
    %v322 = vsub.s32 %v319, %v321
    %v323 = vrot.slane %v307, %v322
    %v325 = vunpack.c.l.s4 1966171168
    %v326 = vunpack.c.0.s8 %v325
    %v327 = vlaneseq
    %v328 = vshrl.u32 %v327, 7
    %v329 = vsub.s32 %v326, %v328
    %v330 = vrot.slane %v308, %v329
    %v332 = vunpack.c.l.s4 1966171168
    %v333 = vunpack.c.0.s8 %v332
    %v334 = vlaneseq
    %v335 = vshrl.u32 %v334, 7
    %v336 = vsub.s32 %v333, %v335
    %v337 = vrot.slane %v309, %v336
    %v338 = vcombine.high %v316, %v316
    %v339 = vcombine.high %v323, %v323
    %v340 = vcombine.high %v330, %v330
    %v341 = vcombine.high %v337, %v337
    %v342 = vlaneseq
    %v343 = vshrl.u32 %v342, 7
    %v344 = vsub.s32 0, %v343
    %v345 = vrot.slane %v267, %v344
    %v346 = vlaneseq
    %v347 = vshrl.u32 %v346, 7
    %v348 = vsub.s32 0, %v347
    %v349 = vrot.slane %v281, %v348
    %v350 = vlaneseq
    %v351 = vshrl.u32 %v350, 7
    %v352 = vsub.s32 0, %v351
    %v353 = vrot.slane %v289, %v352
    %v354 = vlaneseq
    %v355 = vshrl.u32 %v354, 7
    %v356 = vsub.s32 0, %v355
    %v357 = vrot.slane %v291, %v356
    %v358 = vlaneseq
    %v359 = vshrl.u32 %v358, 7
    %v360 = vsub.s32 0, %v359
    %v361 = vrot.slane %v274, %v360
    %v362 = vlaneseq
    %v363 = vshrl.u32 %v362, 7
    %v364 = vsub.s32 0, %v363
    %v365 = vrot.slane %v288, %v364
    %v366 = vlaneseq
    %v367 = vshrl.u32 %v366, 7
    %v368 = vsub.s32 0, %v367
    %v369 = vrot.slane %v290, %v368
    %v370 = vlaneseq
    %v371 = vshrl.u32 %v370, 7
    %v372 = vsub.s32 0, %v371
    %v373 = vrot.slane %v292, %v372
    %v374 = vlaneseq
    %v375 = vshrl.u32 %v374, 7
    %v376 = vsub.s32 0, %v375
    %v377 = vrot.slane %v316, %v376
    %v378 = vlaneseq
    %v379 = vshrl.u32 %v378, 7
    %v380 = vsub.s32 0, %v379
    %v381 = vrot.slane %v330, %v380
    %v382 = vlaneseq
    %v383 = vshrl.u32 %v382, 7
    %v384 = vsub.s32 0, %v383
    %v385 = vrot.slane %v338, %v384
    %v386 = vlaneseq
    %v387 = vshrl.u32 %v386, 7
    %v388 = vsub.s32 0, %v387
    %v389 = vrot.slane %v340, %v388
    %v390 = vlaneseq
    %v391 = vshrl.u32 %v390, 7
    %v392 = vsub.s32 0, %v391
    %v393 = vrot.slane %v323, %v392
    %v394 = vlaneseq
    %v395 = vshrl.u32 %v394, 7
    %v396 = vsub.s32 0, %v395
    %v397 = vrot.slane %v337, %v396
    %v398 = vlaneseq
    %v399 = vshrl.u32 %v398, 7
    %v400 = vsub.s32 0, %v399
    %v401 = vrot.slane %v339, %v400
    %v402 = vlaneseq
    %v403 = vshrl.u32 %v402, 7
    %v404 = vsub.s32 0, %v403
    %v405 = vrot.slane %v341, %v404
    %v422 = vsub.f32 %v345, %v139
    %v423 = vsub.f32 %v345, %v140
    %v424 = vsub.f32 %v349, %v139
    %v425 = vsub.f32 %v349, %v140
    %v426 = vsub.f32 %v353, %v139
    %v427 = vsub.f32 %v353, %v140
    %v428 = vsub.f32 %v357, %v139
    %v429 = vsub.f32 %v357, %v140
    %v430 = vsub.f32 %v361, %v139
    %v431 = vsub.f32 %v361, %v140
    %v432 = vsub.f32 %v365, %v139
    %v433 = vsub.f32 %v365, %v140
    %v434 = vsub.f32 %v369, %v139
    %v435 = vsub.f32 %v369, %v140
    %v436 = vsub.f32 %v373, %v139
    %v437 = vsub.f32 %v373, %v140
    %v438 = vsub.f32 %v377, %v139
    %v439 = vsub.f32 %v377, %v140
    %v440 = vsub.f32 %v381, %v139
    %v441 = vsub.f32 %v381, %v140
    %v442 = vsub.f32 %v385, %v139
    %v443 = vsub.f32 %v385, %v140
    %v444 = vsub.f32 %v389, %v139
    %v445 = vsub.f32 %v389, %v140
    %v446 = vsub.f32 %v393, %v139
    %v447 = vsub.f32 %v393, %v140
    %v448 = vsub.f32 %v397, %v139
    %v449 = vsub.f32 %v397, %v140
    %v450 = vsub.f32 %v401, %v139
    %v451 = vsub.f32 %v401, %v140
    %v452 = vsub.f32 %v405, %v139
    %v453 = vsub.f32 %v405, %v140
    %v454 = vmul.f32 %v422, %v422
    %v455 = vmul.f32 %v423, %v423
    %v456 = vmul.f32 %v424, %v424
    %v457 = vmul.f32 %v425, %v425
    %v458 = vmul.f32 %v426, %v426
    %v459 = vmul.f32 %v427, %v427
    %v460 = vmul.f32 %v428, %v428
    %v461 = vmul.f32 %v429, %v429
    %v462 = vmul.f32 %v430, %v430
    %v463 = vmul.f32 %v431, %v431
    %v464 = vmul.f32 %v432, %v432
    %v465 = vmul.f32 %v433, %v433
    %v466 = vmul.f32 %v434, %v434
    %v467 = vmul.f32 %v435, %v435
    %v468 = vmul.f32 %v436, %v436
    %v469 = vmul.f32 %v437, %v437
    %v470 = vmul.f32 %v438, %v438
    %v471 = vmul.f32 %v439, %v439
    %v472 = vmul.f32 %v440, %v440
    %v473 = vmul.f32 %v441, %v441
    %v474 = vmul.f32 %v442, %v442
    %v475 = vmul.f32 %v443, %v443
    %v476 = vmul.f32 %v444, %v444
    %v477 = vmul.f32 %v445, %v445
    %v478 = vmul.f32 %v446, %v446
    %v479 = vmul.f32 %v447, %v447
    %v480 = vmul.f32 %v448, %v448
    %v481 = vmul.f32 %v449, %v449
    %v482 = vmul.f32 %v450, %v450
    %v483 = vmul.f32 %v451, %v451
    %v484 = vmul.f32 %v452, %v452
    %v485 = vmul.f32 %v453, %v453
    %v488 = vcombine.high %v236, %v236
    %v490 = vunpack.c.l.s4 1966171168
    %v491 = vunpack.c.0.s8 %v490
    %v492 = vlaneseq
    %v493 = vshrl.u32 %v492, 7
    %v494 = vsub.s32 %v491, %v493
    %v495 = vrot.slane %v236, %v494
    %v497 = vunpack.c.l.s4 1966171168
    %v498 = vunpack.c.0.s8 %v497
    %v499 = vlaneseq
    %v500 = vshrl.u32 %v499, 7
    %v501 = vsub.s32 %v498, %v500
    %v502 = vrot.slane %v488, %v501
    %v503 = vcombine.high %v495, %v495
    %v504 = vcombine.high %v502, %v502
    %v506 = vunpack.c.l.s4 1966171168
    %v507 = vunpack.c.0.s8 %v506
    %v508 = vlaneseq
    %v509 = vshrl.u32 %v508, 7
    %v510 = vsub.s32 %v507, %v509
    %v511 = vrot.slane %v495, %v510
    %v513 = vunpack.c.l.s4 1966171168
    %v514 = vunpack.c.0.s8 %v513
    %v515 = vlaneseq
    %v516 = vshrl.u32 %v515, 7
    %v517 = vsub.s32 %v514, %v516
    %v518 = vrot.slane %v502, %v517
    %v520 = vunpack.c.l.s4 1966171168
    %v521 = vunpack.c.0.s8 %v520
    %v522 = vlaneseq
    %v523 = vshrl.u32 %v522, 7
    %v524 = vsub.s32 %v521, %v523
    %v525 = vrot.slane %v503, %v524
    %v527 = vunpack.c.l.s4 1966171168
    %v528 = vunpack.c.0.s8 %v527
    %v529 = vlaneseq
    %v530 = vshrl.u32 %v529, 7
    %v531 = vsub.s32 %v528, %v530
    %v532 = vrot.slane %v504, %v531
    %v533 = vcombine.high %v511, %v511
    %v534 = vcombine.high %v518, %v518
    %v535 = vcombine.high %v525, %v525
    %v536 = vcombine.high %v532, %v532
    %v537 = vcombine.high %v237, %v237
    %v539 = vunpack.c.l.s4 1966171168
    %v540 = vunpack.c.0.s8 %v539
    %v541 = vlaneseq
    %v542 = vshrl.u32 %v541, 7
    %v543 = vsub.s32 %v540, %v542
    %v544 = vrot.slane %v237, %v543
    %v546 = vunpack.c.l.s4 1966171168
    %v547 = vunpack.c.0.s8 %v546
    %v548 = vlaneseq
    %v549 = vshrl.u32 %v548, 7
    %v550 = vsub.s32 %v547, %v549
    %v551 = vrot.slane %v537, %v550
    %v552 = vcombine.high %v544, %v544
    %v553 = vcombine.high %v551, %v551
    %v555 = vunpack.c.l.s4 1966171168
    %v556 = vunpack.c.0.s8 %v555
    %v557 = vlaneseq
    %v558 = vshrl.u32 %v557, 7
    %v559 = vsub.s32 %v556, %v558
    %v560 = vrot.slane %v544, %v559
    %v562 = vunpack.c.l.s4 1966171168
    %v563 = vunpack.c.0.s8 %v562
    %v564 = vlaneseq
    %v565 = vshrl.u32 %v564, 7
    %v566 = vsub.s32 %v563, %v565
    %v567 = vrot.slane %v551, %v566
    %v569 = vunpack.c.l.s4 1966171168
    %v570 = vunpack.c.0.s8 %v569
    %v571 = vlaneseq
    %v572 = vshrl.u32 %v571, 7
    %v573 = vsub.s32 %v570, %v572
    %v574 = vrot.slane %v552, %v573
    %v576 = vunpack.c.l.s4 1966171168
    %v577 = vunpack.c.0.s8 %v576
    %v578 = vlaneseq
    %v579 = vshrl.u32 %v578, 7
    %v580 = vsub.s32 %v577, %v579
    %v581 = vrot.slane %v553, %v580
    %v582 = vcombine.high %v560, %v560
    %v583 = vcombine.high %v567, %v567
    %v584 = vcombine.high %v574, %v574
    %v585 = vcombine.high %v581, %v581
    %v586 = vlaneseq
    %v587 = vshrl.u32 %v586, 7
    %v588 = vsub.s32 0, %v587
    %v589 = vrot.slane %v511, %v588
    %v590 = vlaneseq
    %v591 = vshrl.u32 %v590, 7
    %v592 = vsub.s32 0, %v591
    %v593 = vrot.slane %v525, %v592
    %v594 = vlaneseq
    %v595 = vshrl.u32 %v594, 7
    %v596 = vsub.s32 0, %v595
    %v597 = vrot.slane %v533, %v596
    %v598 = vlaneseq
    %v599 = vshrl.u32 %v598, 7
    %v600 = vsub.s32 0, %v599
    %v601 = vrot.slane %v535, %v600
    %v602 = vlaneseq
    %v603 = vshrl.u32 %v602, 7
    %v604 = vsub.s32 0, %v603
    %v605 = vrot.slane %v518, %v604
    %v606 = vlaneseq
    %v607 = vshrl.u32 %v606, 7
    %v608 = vsub.s32 0, %v607
    %v609 = vrot.slane %v532, %v608
    %v610 = vlaneseq
    %v611 = vshrl.u32 %v610, 7
    %v612 = vsub.s32 0, %v611
    %v613 = vrot.slane %v534, %v612
    %v614 = vlaneseq
    %v615 = vshrl.u32 %v614, 7
    %v616 = vsub.s32 0, %v615
    %v617 = vrot.slane %v536, %v616
    %v618 = vlaneseq
    %v619 = vshrl.u32 %v618, 7
    %v620 = vsub.s32 0, %v619
    %v621 = vrot.slane %v560, %v620
    %v622 = vlaneseq
    %v623 = vshrl.u32 %v622, 7
    %v624 = vsub.s32 0, %v623
    %v625 = vrot.slane %v574, %v624
    %v626 = vlaneseq
    %v627 = vshrl.u32 %v626, 7
    %v628 = vsub.s32 0, %v627
    %v629 = vrot.slane %v582, %v628
    %v630 = vlaneseq
    %v631 = vshrl.u32 %v630, 7
    %v632 = vsub.s32 0, %v631
    %v633 = vrot.slane %v584, %v632
    %v634 = vlaneseq
    %v635 = vshrl.u32 %v634, 7
    %v636 = vsub.s32 0, %v635
    %v637 = vrot.slane %v567, %v636
    %v638 = vlaneseq
    %v639 = vshrl.u32 %v638, 7
    %v640 = vsub.s32 0, %v639
    %v641 = vrot.slane %v581, %v640
    %v642 = vlaneseq
    %v643 = vshrl.u32 %v642, 7
    %v644 = vsub.s32 0, %v643
    %v645 = vrot.slane %v583, %v644
    %v646 = vlaneseq
    %v647 = vshrl.u32 %v646, 7
    %v648 = vsub.s32 0, %v647
    %v649 = vrot.slane %v585, %v648
    %v666 = vmul.f32 %v454, %v589
    %v667 = vmul.f32 %v455, %v589
    %v668 = vmul.f32 %v456, %v593
    %v669 = vmul.f32 %v457, %v593
    %v670 = vmul.f32 %v458, %v597
    %v671 = vmul.f32 %v459, %v597
    %v672 = vmul.f32 %v460, %v601
    %v673 = vmul.f32 %v461, %v601
    %v674 = vmul.f32 %v462, %v605
    %v675 = vmul.f32 %v463, %v605
    %v676 = vmul.f32 %v464, %v609
    %v677 = vmul.f32 %v465, %v609
    %v678 = vmul.f32 %v466, %v613
    %v679 = vmul.f32 %v467, %v613
    %v680 = vmul.f32 %v468, %v617
    %v681 = vmul.f32 %v469, %v617
    %v682 = vmul.f32 %v470, %v621
    %v683 = vmul.f32 %v471, %v621
    %v684 = vmul.f32 %v472, %v625
    %v685 = vmul.f32 %v473, %v625
    %v686 = vmul.f32 %v474, %v629
    %v687 = vmul.f32 %v475, %v629
    %v688 = vmul.f32 %v476, %v633
    %v689 = vmul.f32 %v477, %v633
    %v690 = vmul.f32 %v478, %v637
    %v691 = vmul.f32 %v479, %v637
    %v692 = vmul.f32 %v480, %v641
    %v693 = vmul.f32 %v481, %v641
    %v694 = vmul.f32 %v482, %v645
    %v695 = vmul.f32 %v483, %v645
    %v696 = vmul.f32 %v484, %v649
    %v697 = vmul.f32 %v485, %v649
    %v700 = vcombine.high %v240, %v240
    %v702 = vunpack.c.l.s4 1966171168
    %v703 = vunpack.c.0.s8 %v702
    %v704 = vlaneseq
    %v705 = vshrl.u32 %v704, 7
    %v706 = vsub.s32 %v703, %v705
    %v707 = vrot.slane %v240, %v706
    %v709 = vunpack.c.l.s4 1966171168
    %v710 = vunpack.c.0.s8 %v709
    %v711 = vlaneseq
    %v712 = vshrl.u32 %v711, 7
    %v713 = vsub.s32 %v710, %v712
    %v714 = vrot.slane %v700, %v713
    %v715 = vcombine.high %v707, %v707
    %v716 = vcombine.high %v714, %v714
    %v718 = vunpack.c.l.s4 1966171168
    %v719 = vunpack.c.0.s8 %v718
    %v720 = vlaneseq
    %v721 = vshrl.u32 %v720, 7
    %v722 = vsub.s32 %v719, %v721
    %v723 = vrot.slane %v707, %v722
    %v725 = vunpack.c.l.s4 1966171168
    %v726 = vunpack.c.0.s8 %v725
    %v727 = vlaneseq
    %v728 = vshrl.u32 %v727, 7
    %v729 = vsub.s32 %v726, %v728
    %v730 = vrot.slane %v714, %v729
    %v732 = vunpack.c.l.s4 1966171168
    %v733 = vunpack.c.0.s8 %v732
    %v734 = vlaneseq
    %v735 = vshrl.u32 %v734, 7
    %v736 = vsub.s32 %v733, %v735
    %v737 = vrot.slane %v715, %v736
    %v739 = vunpack.c.l.s4 1966171168
    %v740 = vunpack.c.0.s8 %v739
    %v741 = vlaneseq
    %v742 = vshrl.u32 %v741, 7
    %v743 = vsub.s32 %v740, %v742
    %v744 = vrot.slane %v716, %v743
    %v745 = vcombine.high %v723, %v723
    %v746 = vcombine.high %v730, %v730
    %v747 = vcombine.high %v737, %v737
    %v748 = vcombine.high %v744, %v744
    %v749 = vcombine.high %v241, %v241
    %v751 = vunpack.c.l.s4 1966171168
    %v752 = vunpack.c.0.s8 %v751
    %v753 = vlaneseq
    %v754 = vshrl.u32 %v753, 7
    %v755 = vsub.s32 %v752, %v754
    %v756 = vrot.slane %v241, %v755
    %v758 = vunpack.c.l.s4 1966171168
    %v759 = vunpack.c.0.s8 %v758
    %v760 = vlaneseq
    %v761 = vshrl.u32 %v760, 7
    %v762 = vsub.s32 %v759, %v761
    %v763 = vrot.slane %v749, %v762
    %v764 = vcombine.high %v756, %v756
    %v765 = vcombine.high %v763, %v763
    %v767 = vunpack.c.l.s4 1966171168
    %v768 = vunpack.c.0.s8 %v767
    %v769 = vlaneseq
    %v770 = vshrl.u32 %v769, 7
    %v771 = vsub.s32 %v768, %v770
    %v772 = vrot.slane %v756, %v771
    %v774 = vunpack.c.l.s4 1966171168
    %v775 = vunpack.c.0.s8 %v774
    %v776 = vlaneseq
    %v777 = vshrl.u32 %v776, 7
    %v778 = vsub.s32 %v775, %v777
    %v779 = vrot.slane %v763, %v778
    %v781 = vunpack.c.l.s4 1966171168
    %v782 = vunpack.c.0.s8 %v781
    %v783 = vlaneseq
    %v784 = vshrl.u32 %v783, 7
    %v785 = vsub.s32 %v782, %v784
    %v786 = vrot.slane %v764, %v785
    %v788 = vunpack.c.l.s4 1966171168
    %v789 = vunpack.c.0.s8 %v788
    %v790 = vlaneseq
    %v791 = vshrl.u32 %v790, 7
    %v792 = vsub.s32 %v789, %v791
    %v793 = vrot.slane %v765, %v792
    %v794 = vcombine.high %v772, %v772
    %v795 = vcombine.high %v779, %v779
    %v796 = vcombine.high %v786, %v786
    %v797 = vcombine.high %v793, %v793
    %v798 = vlaneseq
    %v799 = vshrl.u32 %v798, 7
    %v800 = vsub.s32 0, %v799
    %v801 = vrot.slane %v723, %v800
    %v802 = vlaneseq
    %v803 = vshrl.u32 %v802, 7
    %v804 = vsub.s32 0, %v803
    %v805 = vrot.slane %v737, %v804
    %v806 = vlaneseq
    %v807 = vshrl.u32 %v806, 7
    %v808 = vsub.s32 0, %v807
    %v809 = vrot.slane %v745, %v808
    %v810 = vlaneseq
    %v811 = vshrl.u32 %v810, 7
    %v812 = vsub.s32 0, %v811
    %v813 = vrot.slane %v747, %v812
    %v814 = vlaneseq
    %v815 = vshrl.u32 %v814, 7
    %v816 = vsub.s32 0, %v815
    %v817 = vrot.slane %v730, %v816
    %v818 = vlaneseq
    %v819 = vshrl.u32 %v818, 7
    %v820 = vsub.s32 0, %v819
    %v821 = vrot.slane %v744, %v820
    %v822 = vlaneseq
    %v823 = vshrl.u32 %v822, 7
    %v824 = vsub.s32 0, %v823
    %v825 = vrot.slane %v746, %v824
    %v826 = vlaneseq
    %v827 = vshrl.u32 %v826, 7
    %v828 = vsub.s32 0, %v827
    %v829 = vrot.slane %v748, %v828
    %v830 = vlaneseq
    %v831 = vshrl.u32 %v830, 7
    %v832 = vsub.s32 0, %v831
    %v833 = vrot.slane %v772, %v832
    %v834 = vlaneseq
    %v835 = vshrl.u32 %v834, 7
    %v836 = vsub.s32 0, %v835
    %v837 = vrot.slane %v786, %v836
    %v838 = vlaneseq
    %v839 = vshrl.u32 %v838, 7
    %v840 = vsub.s32 0, %v839
    %v841 = vrot.slane %v794, %v840
    %v842 = vlaneseq
    %v843 = vshrl.u32 %v842, 7
    %v844 = vsub.s32 0, %v843
    %v845 = vrot.slane %v796, %v844
    %v846 = vlaneseq
    %v847 = vshrl.u32 %v846, 7
    %v848 = vsub.s32 0, %v847
    %v849 = vrot.slane %v779, %v848
    %v850 = vlaneseq
    %v851 = vshrl.u32 %v850, 7
    %v852 = vsub.s32 0, %v851
    %v853 = vrot.slane %v793, %v852
    %v854 = vlaneseq
    %v855 = vshrl.u32 %v854, 7
    %v856 = vsub.s32 0, %v855
    %v857 = vrot.slane %v795, %v856
    %v858 = vlaneseq
    %v859 = vshrl.u32 %v858, 7
    %v860 = vsub.s32 0, %v859
    %v861 = vrot.slane %v797, %v860
    %v878 = vadd.f32 %v666, %v801
    %v879 = vadd.f32 %v667, %v801
    %v880 = vadd.f32 %v668, %v805
    %v881 = vadd.f32 %v669, %v805
    %v882 = vadd.f32 %v670, %v809
    %v883 = vadd.f32 %v671, %v809
    %v884 = vadd.f32 %v672, %v813
    %v885 = vadd.f32 %v673, %v813
    %v886 = vadd.f32 %v674, %v817
    %v887 = vadd.f32 %v675, %v817
    %v888 = vadd.f32 %v676, %v821
    %v889 = vadd.f32 %v677, %v821
    %v890 = vadd.f32 %v678, %v825
    %v891 = vadd.f32 %v679, %v825
    %v892 = vadd.f32 %v680, %v829
    %v893 = vadd.f32 %v681, %v829
    %v894 = vadd.f32 %v682, %v833
    %v895 = vadd.f32 %v683, %v833
    %v896 = vadd.f32 %v684, %v837
    %v897 = vadd.f32 %v685, %v837
    %v898 = vadd.f32 %v686, %v841
    %v899 = vadd.f32 %v687, %v841
    %v900 = vadd.f32 %v688, %v845
    %v901 = vadd.f32 %v689, %v845
    %v902 = vadd.f32 %v690, %v849
    %v903 = vadd.f32 %v691, %v849
    %v904 = vadd.f32 %v692, %v853
    %v905 = vadd.f32 %v693, %v853
    %v906 = vadd.f32 %v694, %v857
    %v907 = vadd.f32 %v695, %v857
    %v908 = vadd.f32 %v696, %v861
    %v909 = vadd.f32 %v697, %v861
    %v910 = vmax.f32 %v878, 0.0
    %v911 = vmax.f32 %v879, 0.0
    %v912 = vmax.f32 %v880, 0.0
    %v913 = vmax.f32 %v881, 0.0
    %v914 = vmax.f32 %v882, 0.0
    %v915 = vmax.f32 %v883, 0.0
    %v916 = vmax.f32 %v884, 0.0
    %v917 = vmax.f32 %v885, 0.0
    %v918 = vmax.f32 %v886, 0.0
    %v919 = vmax.f32 %v887, 0.0
    %v920 = vmax.f32 %v888, 0.0
    %v921 = vmax.f32 %v889, 0.0
    %v922 = vmax.f32 %v890, 0.0
    %v923 = vmax.f32 %v891, 0.0
    %v924 = vmax.f32 %v892, 0.0
    %v925 = vmax.f32 %v893, 0.0
    %v926 = vmax.f32 %v894, 0.0
    %v927 = vmax.f32 %v895, 0.0
    %v928 = vmax.f32 %v896, 0.0
    %v929 = vmax.f32 %v897, 0.0
    %v930 = vmax.f32 %v898, 0.0
    %v931 = vmax.f32 %v899, 0.0
    %v932 = vmax.f32 %v900, 0.0
    %v933 = vmax.f32 %v901, 0.0
    %v934 = vmax.f32 %v902, 0.0
    %v935 = vmax.f32 %v903, 0.0
    %v936 = vmax.f32 %v904, 0.0
    %v937 = vmax.f32 %v905, 0.0
    %v938 = vmax.f32 %v906, 0.0
    %v939 = vmax.f32 %v907, 0.0
    %v940 = vmax.f32 %v908, 0.0
    %v941 = vmax.f32 %v909, 0.0
    %942 = vadd.xlane.f32.xlu0 %v910
    %v943 = vpop.xlane.xlu0 %942
    %944 = vadd.xlane.f32.xlu0 %v911
    %v945 = vpop.xlane.xlu0 %944
    %946 = vadd.xlane.f32.xlu0 %v912
    %v947 = vpop.xlane.xlu0 %946
    %948 = vadd.xlane.f32.xlu0 %v913
    %v949 = vpop.xlane.xlu0 %948
    %950 = vadd.xlane.f32.xlu0 %v914
    %v951 = vpop.xlane.xlu0 %950
    %952 = vadd.xlane.f32.xlu0 %v915
    %v953 = vpop.xlane.xlu0 %952
    %954 = vadd.xlane.f32.xlu0 %v916
    %v955 = vpop.xlane.xlu0 %954
    %956 = vadd.xlane.f32.xlu0 %v917
    %v957 = vpop.xlane.xlu0 %956
    %958 = vadd.xlane.f32.xlu0 %v918
    %v959 = vpop.xlane.xlu0 %958
    %960 = vadd.xlane.f32.xlu0 %v919
    %v961 = vpop.xlane.xlu0 %960
    %962 = vadd.xlane.f32.xlu0 %v920
    %v963 = vpop.xlane.xlu0 %962
    %964 = vadd.xlane.f32.xlu0 %v921
    %v965 = vpop.xlane.xlu0 %964
    %966 = vadd.xlane.f32.xlu0 %v922
    %v967 = vpop.xlane.xlu0 %966
    %968 = vadd.xlane.f32.xlu0 %v923
    %v969 = vpop.xlane.xlu0 %968
    %970 = vadd.xlane.f32.xlu0 %v924
    %v971 = vpop.xlane.xlu0 %970
    %972 = vadd.xlane.f32.xlu0 %v925
    %v973 = vpop.xlane.xlu0 %972
    %974 = vadd.xlane.f32.xlu0 %v926
    %v975 = vpop.xlane.xlu0 %974
    %976 = vadd.xlane.f32.xlu0 %v927
    %v977 = vpop.xlane.xlu0 %976
    %978 = vadd.xlane.f32.xlu0 %v928
    %v979 = vpop.xlane.xlu0 %978
    %980 = vadd.xlane.f32.xlu0 %v929
    %v981 = vpop.xlane.xlu0 %980
    %982 = vadd.xlane.f32.xlu0 %v930
    %v983 = vpop.xlane.xlu0 %982
    %984 = vadd.xlane.f32.xlu0 %v931
    %v985 = vpop.xlane.xlu0 %984
    %986 = vadd.xlane.f32.xlu0 %v932
    %v987 = vpop.xlane.xlu0 %986
    %988 = vadd.xlane.f32.xlu0 %v933
    %v989 = vpop.xlane.xlu0 %988
    %990 = vadd.xlane.f32.xlu0 %v934
    %v991 = vpop.xlane.xlu0 %990
    %992 = vadd.xlane.f32.xlu0 %v935
    %v993 = vpop.xlane.xlu0 %992
    %994 = vadd.xlane.f32.xlu0 %v936
    %v995 = vpop.xlane.xlu0 %994
    %996 = vadd.xlane.f32.xlu0 %v937
    %v997 = vpop.xlane.xlu0 %996
    %998 = vadd.xlane.f32.xlu0 %v938
    %v999 = vpop.xlane.xlu0 %998
    %1000 = vadd.xlane.f32.xlu0 %v939
    %v1001 = vpop.xlane.xlu0 %1000
    %1002 = vadd.xlane.f32.xlu0 %v940
    %v1003 = vpop.xlane.xlu0 %1002
    %1004 = vadd.xlane.f32.xlu0 %v941
    %v1005 = vpop.xlane.xlu0 %1004
    %v1006 = vadd.f32 %v943, 0.0
    %v1007 = vadd.f32 %v945, 0.0
    %v1008 = vadd.f32 %v947, 0.0
    %v1009 = vadd.f32 %v949, 0.0
    %v1010 = vadd.f32 %v951, 0.0
    %v1011 = vadd.f32 %v953, 0.0
    %v1012 = vadd.f32 %v955, 0.0
    %v1013 = vadd.f32 %v957, 0.0
    %v1014 = vadd.f32 %v959, 0.0
    %v1015 = vadd.f32 %v961, 0.0
    %v1016 = vadd.f32 %v963, 0.0
    %v1017 = vadd.f32 %v965, 0.0
    %v1018 = vadd.f32 %v967, 0.0
    %v1019 = vadd.f32 %v969, 0.0
    %v1020 = vadd.f32 %v971, 0.0
    %v1021 = vadd.f32 %v973, 0.0
    %v1022 = vadd.f32 %v975, 0.0
    %v1023 = vadd.f32 %v977, 0.0
    %v1024 = vadd.f32 %v979, 0.0
    %v1025 = vadd.f32 %v981, 0.0
    %v1026 = vadd.f32 %v983, 0.0
    %v1027 = vadd.f32 %v985, 0.0
    %v1028 = vadd.f32 %v987, 0.0
    %v1029 = vadd.f32 %v989, 0.0
    %v1030 = vadd.f32 %v991, 0.0
    %v1031 = vadd.f32 %v993, 0.0
    %v1032 = vadd.f32 %v995, 0.0
    %v1033 = vadd.f32 %v997, 0.0
    %v1034 = vadd.f32 %v999, 0.0
    %v1035 = vadd.f32 %v1001, 0.0
    %v1036 = vadd.f32 %v1003, 0.0
    %v1037 = vadd.f32 %v1005, 0.0
    %v1040 = vlaneseq
    %v1041 = vshrl.u32 %v1040, 7
    %v1042 = vsub.s32 0, %v1041
    %v1043 = vrot.slane %v226, %v1042
    %1045 = vbcast.lane.b32.xlu0 %v1043, 256
    %v1046 = vpop.permute.xlu0 %1045
    %s1048 = sor.u32 256, 8
    %1049 = vbcast.lane.b32.xlu0 %v1043, %s1048
    %v1050 = vpop.permute.xlu0 %1049
    %v1051 = vlaneseq
    %v1052 = vshrl.u32 %v1051, 7
    %v1053 = vsub.s32 1, %v1052
    %v1054 = vrot.slane %v226, %v1053
    %1056 = vbcast.lane.b32.xlu0 %v1054, 256
    %v1057 = vpop.permute.xlu0 %1056
    %s1059 = sor.u32 256, 8
    %1060 = vbcast.lane.b32.xlu0 %v1054, %s1059
    %v1061 = vpop.permute.xlu0 %1060
    %v1062 = vlaneseq
    %v1063 = vshrl.u32 %v1062, 7
    %v1064 = vsub.s32 2, %v1063
    %v1065 = vrot.slane %v226, %v1064
    %1067 = vbcast.lane.b32.xlu0 %v1065, 256
    %v1068 = vpop.permute.xlu0 %1067
    %s1070 = sor.u32 256, 8
    %1071 = vbcast.lane.b32.xlu0 %v1065, %s1070
    %v1072 = vpop.permute.xlu0 %1071
    %v1073 = vlaneseq
    %v1074 = vshrl.u32 %v1073, 7
    %v1075 = vsub.s32 3, %v1074
    %v1076 = vrot.slane %v226, %v1075
    %1078 = vbcast.lane.b32.xlu0 %v1076, 256
    %v1079 = vpop.permute.xlu0 %1078
    %s1081 = sor.u32 256, 8
    %1082 = vbcast.lane.b32.xlu0 %v1076, %s1081
    %v1083 = vpop.permute.xlu0 %1082
    %v1084 = vlaneseq
    %v1085 = vshrl.u32 %v1084, 7
    %v1086 = vsub.s32 4, %v1085
    %v1087 = vrot.slane %v226, %v1086
    %1089 = vbcast.lane.b32.xlu0 %v1087, 256
    %v1090 = vpop.permute.xlu0 %1089
    %s1092 = sor.u32 256, 8
    %1093 = vbcast.lane.b32.xlu0 %v1087, %s1092
    %v1094 = vpop.permute.xlu0 %1093
    %v1095 = vlaneseq
    %v1096 = vshrl.u32 %v1095, 7
    %v1097 = vsub.s32 5, %v1096
    %v1098 = vrot.slane %v226, %v1097
    %1100 = vbcast.lane.b32.xlu0 %v1098, 256
    %v1101 = vpop.permute.xlu0 %1100
    %s1103 = sor.u32 256, 8
    %1104 = vbcast.lane.b32.xlu0 %v1098, %s1103
    %v1105 = vpop.permute.xlu0 %1104
    %v1106 = vlaneseq
    %v1107 = vshrl.u32 %v1106, 7
    %v1108 = vsub.s32 6, %v1107
    %v1109 = vrot.slane %v226, %v1108
    %1111 = vbcast.lane.b32.xlu0 %v1109, 256
    %v1112 = vpop.permute.xlu0 %1111
    %s1114 = sor.u32 256, 8
    %1115 = vbcast.lane.b32.xlu0 %v1109, %s1114
    %v1116 = vpop.permute.xlu0 %1115
    %v1117 = vlaneseq
    %v1118 = vshrl.u32 %v1117, 7
    %v1119 = vsub.s32 7, %v1118
    %v1120 = vrot.slane %v226, %v1119
    %1122 = vbcast.lane.b32.xlu0 %v1120, 256
    %v1123 = vpop.permute.xlu0 %1122
    %s1125 = sor.u32 256, 8
    %1126 = vbcast.lane.b32.xlu0 %v1120, %s1125
    %v1127 = vpop.permute.xlu0 %1126
    %v1128 = vlaneseq
    %v1129 = vshrl.u32 %v1128, 7
    %v1130 = vsub.s32 0, %v1129
    %v1131 = vrot.slane %v231, %v1130
    %1133 = vbcast.lane.b32.xlu0 %v1131, 256
    %v1134 = vpop.permute.xlu0 %1133
    %s1136 = sor.u32 256, 8
    %1137 = vbcast.lane.b32.xlu0 %v1131, %s1136
    %v1138 = vpop.permute.xlu0 %1137
    %v1139 = vlaneseq
    %v1140 = vshrl.u32 %v1139, 7
    %v1141 = vsub.s32 1, %v1140
    %v1142 = vrot.slane %v231, %v1141
    %1144 = vbcast.lane.b32.xlu0 %v1142, 256
    %v1145 = vpop.permute.xlu0 %1144
    %s1147 = sor.u32 256, 8
    %1148 = vbcast.lane.b32.xlu0 %v1142, %s1147
    %v1149 = vpop.permute.xlu0 %1148
    %v1150 = vlaneseq
    %v1151 = vshrl.u32 %v1150, 7
    %v1152 = vsub.s32 2, %v1151
    %v1153 = vrot.slane %v231, %v1152
    %1155 = vbcast.lane.b32.xlu0 %v1153, 256
    %v1156 = vpop.permute.xlu0 %1155
    %s1158 = sor.u32 256, 8
    %1159 = vbcast.lane.b32.xlu0 %v1153, %s1158
    %v1160 = vpop.permute.xlu0 %1159
    %v1161 = vlaneseq
    %v1162 = vshrl.u32 %v1161, 7
    %v1163 = vsub.s32 3, %v1162
    %v1164 = vrot.slane %v231, %v1163
    %1166 = vbcast.lane.b32.xlu0 %v1164, 256
    %v1167 = vpop.permute.xlu0 %1166
    %s1169 = sor.u32 256, 8
    %1170 = vbcast.lane.b32.xlu0 %v1164, %s1169
    %v1171 = vpop.permute.xlu0 %1170
    %v1172 = vlaneseq
    %v1173 = vshrl.u32 %v1172, 7
    %v1174 = vsub.s32 4, %v1173
    %v1175 = vrot.slane %v231, %v1174
    %1177 = vbcast.lane.b32.xlu0 %v1175, 256
    %v1178 = vpop.permute.xlu0 %1177
    %s1180 = sor.u32 256, 8
    %1181 = vbcast.lane.b32.xlu0 %v1175, %s1180
    %v1182 = vpop.permute.xlu0 %1181
    %v1183 = vlaneseq
    %v1184 = vshrl.u32 %v1183, 7
    %v1185 = vsub.s32 5, %v1184
    %v1186 = vrot.slane %v231, %v1185
    %1188 = vbcast.lane.b32.xlu0 %v1186, 256
    %v1189 = vpop.permute.xlu0 %1188
    %s1191 = sor.u32 256, 8
    %1192 = vbcast.lane.b32.xlu0 %v1186, %s1191
    %v1193 = vpop.permute.xlu0 %1192
    %v1194 = vlaneseq
    %v1195 = vshrl.u32 %v1194, 7
    %v1196 = vsub.s32 6, %v1195
    %v1197 = vrot.slane %v231, %v1196
    %1199 = vbcast.lane.b32.xlu0 %v1197, 256
    %v1200 = vpop.permute.xlu0 %1199
    %s1202 = sor.u32 256, 8
    %1203 = vbcast.lane.b32.xlu0 %v1197, %s1202
    %v1204 = vpop.permute.xlu0 %1203
    %v1205 = vlaneseq
    %v1206 = vshrl.u32 %v1205, 7
    %v1207 = vsub.s32 7, %v1206
    %v1208 = vrot.slane %v231, %v1207
    %1210 = vbcast.lane.b32.xlu0 %v1208, 256
    %v1211 = vpop.permute.xlu0 %1210
    %s1213 = sor.u32 256, 8
    %1214 = vbcast.lane.b32.xlu0 %v1208, %s1213
    %v1215 = vpop.permute.xlu0 %1214
    %v1248 = vsub.f32 %v1006, %v1046
    %v1249 = vsub.f32 %v1007, %v1050
    %v1250 = vsub.f32 %v1008, %v1057
    %v1251 = vsub.f32 %v1009, %v1061
    %v1252 = vsub.f32 %v1010, %v1068
    %v1253 = vsub.f32 %v1011, %v1072
    %v1254 = vsub.f32 %v1012, %v1079
    %v1255 = vsub.f32 %v1013, %v1083
    %v1256 = vsub.f32 %v1014, %v1090
    %v1257 = vsub.f32 %v1015, %v1094
    %v1258 = vsub.f32 %v1016, %v1101
    %v1259 = vsub.f32 %v1017, %v1105
    %v1260 = vsub.f32 %v1018, %v1112
    %v1261 = vsub.f32 %v1019, %v1116
    %v1262 = vsub.f32 %v1020, %v1123
    %v1263 = vsub.f32 %v1021, %v1127
    %v1264 = vsub.f32 %v1022, %v1134
    %v1265 = vsub.f32 %v1023, %v1138
    %v1266 = vsub.f32 %v1024, %v1145
    %v1267 = vsub.f32 %v1025, %v1149
    %v1268 = vsub.f32 %v1026, %v1156
    %v1269 = vsub.f32 %v1027, %v1160
    %v1270 = vsub.f32 %v1028, %v1167
    %v1271 = vsub.f32 %v1029, %v1171
    %v1272 = vsub.f32 %v1030, %v1178
    %v1273 = vsub.f32 %v1031, %v1182
    %v1274 = vsub.f32 %v1032, %v1189
    %v1275 = vsub.f32 %v1033, %v1193
    %v1276 = vsub.f32 %v1034, %v1200
    %v1277 = vsub.f32 %v1035, %v1204
    %v1278 = vsub.f32 %v1036, %v1211
    %v1279 = vsub.f32 %v1037, %v1215
    %v1280 = vmax.f32 %v1248, 0.0
    %v1281 = vmax.f32 %v1249, 0.0
    %v1282 = vmax.f32 %v1250, 0.0
    %v1283 = vmax.f32 %v1251, 0.0
    %v1284 = vmax.f32 %v1252, 0.0
    %v1285 = vmax.f32 %v1253, 0.0
    %v1286 = vmax.f32 %v1254, 0.0
    %v1287 = vmax.f32 %v1255, 0.0
    %v1288 = vmax.f32 %v1256, 0.0
    %v1289 = vmax.f32 %v1257, 0.0
    %v1290 = vmax.f32 %v1258, 0.0
    %v1291 = vmax.f32 %v1259, 0.0
    %v1292 = vmax.f32 %v1260, 0.0
    %v1293 = vmax.f32 %v1261, 0.0
    %v1294 = vmax.f32 %v1262, 0.0
    %v1295 = vmax.f32 %v1263, 0.0
    %v1296 = vmax.f32 %v1264, 0.0
    %v1297 = vmax.f32 %v1265, 0.0
    %v1298 = vmax.f32 %v1266, 0.0
    %v1299 = vmax.f32 %v1267, 0.0
    %v1300 = vmax.f32 %v1268, 0.0
    %v1301 = vmax.f32 %v1269, 0.0
    %v1302 = vmax.f32 %v1270, 0.0
    %v1303 = vmax.f32 %v1271, 0.0
    %v1304 = vmax.f32 %v1272, 0.0
    %v1305 = vmax.f32 %v1273, 0.0
    %v1306 = vmax.f32 %v1274, 0.0
    %v1307 = vmax.f32 %v1275, 0.0
    %v1308 = vmax.f32 %v1276, 0.0
    %v1309 = vmax.f32 %v1277, 0.0
    %v1310 = vmax.f32 %v1278, 0.0
    %v1311 = vmax.f32 %v1279, 0.0
    %v1312 = vld [vmem:[#allocation13] sm:$0xff]
    %v1313 = vld [vmem:[#allocation13 + $0x8] sm:$0xff]
    %v1314 = vld [vmem:[#allocation10] sm:$0xff]
    %v1315 = vld [vmem:[#allocation10 + $0x8] sm:$0xff]
    %v1318 = vlaneseq
    %v1319 = vshrl.u32 %v1318, 7
    %v1320 = vsub.s32 0, %v1319
    %v1321 = vrot.slane %v1314, %v1320
    %1323 = vbcast.lane.b32.xlu0 %v1321, 256
    %v1324 = vpop.permute.xlu0 %1323
    %s1326 = sor.u32 256, 8
    %1327 = vbcast.lane.b32.xlu0 %v1321, %s1326
    %v1328 = vpop.permute.xlu0 %1327
    %v1329 = vlaneseq
    %v1330 = vshrl.u32 %v1329, 7
    %v1331 = vsub.s32 1, %v1330
    %v1332 = vrot.slane %v1314, %v1331
    %1334 = vbcast.lane.b32.xlu0 %v1332, 256
    %v1335 = vpop.permute.xlu0 %1334
    %s1337 = sor.u32 256, 8
    %1338 = vbcast.lane.b32.xlu0 %v1332, %s1337
    %v1339 = vpop.permute.xlu0 %1338
    %v1340 = vlaneseq
    %v1341 = vshrl.u32 %v1340, 7
    %v1342 = vsub.s32 2, %v1341
    %v1343 = vrot.slane %v1314, %v1342
    %1345 = vbcast.lane.b32.xlu0 %v1343, 256
    %v1346 = vpop.permute.xlu0 %1345
    %s1348 = sor.u32 256, 8
    %1349 = vbcast.lane.b32.xlu0 %v1343, %s1348
    %v1350 = vpop.permute.xlu0 %1349
    %v1351 = vlaneseq
    %v1352 = vshrl.u32 %v1351, 7
    %v1353 = vsub.s32 3, %v1352
    %v1354 = vrot.slane %v1314, %v1353
    %1356 = vbcast.lane.b32.xlu0 %v1354, 256
    %v1357 = vpop.permute.xlu0 %1356
    %s1359 = sor.u32 256, 8
    %1360 = vbcast.lane.b32.xlu0 %v1354, %s1359
    %v1361 = vpop.permute.xlu0 %1360
    %v1362 = vlaneseq
    %v1363 = vshrl.u32 %v1362, 7
    %v1364 = vsub.s32 4, %v1363
    %v1365 = vrot.slane %v1314, %v1364
    %1367 = vbcast.lane.b32.xlu0 %v1365, 256
    %v1368 = vpop.permute.xlu0 %1367
    %s1370 = sor.u32 256, 8
    %1371 = vbcast.lane.b32.xlu0 %v1365, %s1370
    %v1372 = vpop.permute.xlu0 %1371
    %v1373 = vlaneseq
    %v1374 = vshrl.u32 %v1373, 7
    %v1375 = vsub.s32 5, %v1374
    %v1376 = vrot.slane %v1314, %v1375
    %1378 = vbcast.lane.b32.xlu0 %v1376, 256
    %v1379 = vpop.permute.xlu0 %1378
    %s1381 = sor.u32 256, 8
    %1382 = vbcast.lane.b32.xlu0 %v1376, %s1381
    %v1383 = vpop.permute.xlu0 %1382
    %v1384 = vlaneseq
    %v1385 = vshrl.u32 %v1384, 7
    %v1386 = vsub.s32 6, %v1385
    %v1387 = vrot.slane %v1314, %v1386
    %1389 = vbcast.lane.b32.xlu0 %v1387, 256
    %v1390 = vpop.permute.xlu0 %1389
    %s1392 = sor.u32 256, 8
    %1393 = vbcast.lane.b32.xlu0 %v1387, %s1392
    %v1394 = vpop.permute.xlu0 %1393
    %v1395 = vlaneseq
    %v1396 = vshrl.u32 %v1395, 7
    %v1397 = vsub.s32 7, %v1396
    %v1398 = vrot.slane %v1314, %v1397
    %1400 = vbcast.lane.b32.xlu0 %v1398, 256
    %v1401 = vpop.permute.xlu0 %1400
    %s1403 = sor.u32 256, 8
    %1404 = vbcast.lane.b32.xlu0 %v1398, %s1403
    %v1405 = vpop.permute.xlu0 %1404
    %v1406 = vlaneseq
    %v1407 = vshrl.u32 %v1406, 7
    %v1408 = vsub.s32 0, %v1407
    %v1409 = vrot.slane %v1315, %v1408
    %1411 = vbcast.lane.b32.xlu0 %v1409, 256
    %v1412 = vpop.permute.xlu0 %1411
    %s1414 = sor.u32 256, 8
    %1415 = vbcast.lane.b32.xlu0 %v1409, %s1414
    %v1416 = vpop.permute.xlu0 %1415
    %v1417 = vlaneseq
    %v1418 = vshrl.u32 %v1417, 7
    %v1419 = vsub.s32 1, %v1418
    %v1420 = vrot.slane %v1315, %v1419
    %1422 = vbcast.lane.b32.xlu0 %v1420, 256
    %v1423 = vpop.permute.xlu0 %1422
    %s1425 = sor.u32 256, 8
    %1426 = vbcast.lane.b32.xlu0 %v1420, %s1425
    %v1427 = vpop.permute.xlu0 %1426
    %v1428 = vlaneseq
    %v1429 = vshrl.u32 %v1428, 7
    %v1430 = vsub.s32 2, %v1429
    %v1431 = vrot.slane %v1315, %v1430
    %1433 = vbcast.lane.b32.xlu0 %v1431, 256
    %v1434 = vpop.permute.xlu0 %1433
    %s1436 = sor.u32 256, 8
    %1437 = vbcast.lane.b32.xlu0 %v1431, %s1436
    %v1438 = vpop.permute.xlu0 %1437
    %v1439 = vlaneseq
    %v1440 = vshrl.u32 %v1439, 7
    %v1441 = vsub.s32 3, %v1440
    %v1442 = vrot.slane %v1315, %v1441
    %1444 = vbcast.lane.b32.xlu0 %v1442, 256
    %v1445 = vpop.permute.xlu0 %1444
    %s1447 = sor.u32 256, 8
    %1448 = vbcast.lane.b32.xlu0 %v1442, %s1447
    %v1449 = vpop.permute.xlu0 %1448
    %v1450 = vlaneseq
    %v1451 = vshrl.u32 %v1450, 7
    %v1452 = vsub.s32 4, %v1451
    %v1453 = vrot.slane %v1315, %v1452
    %1455 = vbcast.lane.b32.xlu0 %v1453, 256
    %v1456 = vpop.permute.xlu0 %1455
    %s1458 = sor.u32 256, 8
    %1459 = vbcast.lane.b32.xlu0 %v1453, %s1458
    %v1460 = vpop.permute.xlu0 %1459
    %v1461 = vlaneseq
    %v1462 = vshrl.u32 %v1461, 7
    %v1463 = vsub.s32 5, %v1462
    %v1464 = vrot.slane %v1315, %v1463
    %1466 = vbcast.lane.b32.xlu0 %v1464, 256
    %v1467 = vpop.permute.xlu0 %1466
    %s1469 = sor.u32 256, 8
    %1470 = vbcast.lane.b32.xlu0 %v1464, %s1469
    %v1471 = vpop.permute.xlu0 %1470
    %v1472 = vlaneseq
    %v1473 = vshrl.u32 %v1472, 7
    %v1474 = vsub.s32 6, %v1473
    %v1475 = vrot.slane %v1315, %v1474
    %1477 = vbcast.lane.b32.xlu0 %v1475, 256
    %v1478 = vpop.permute.xlu0 %1477
    %s1480 = sor.u32 256, 8
    %1481 = vbcast.lane.b32.xlu0 %v1475, %s1480
    %v1482 = vpop.permute.xlu0 %1481
    %v1483 = vlaneseq
    %v1484 = vshrl.u32 %v1483, 7
    %v1485 = vsub.s32 7, %v1484
    %v1486 = vrot.slane %v1315, %v1485
    %1488 = vbcast.lane.b32.xlu0 %v1486, 256
    %v1489 = vpop.permute.xlu0 %1488
    %s1491 = sor.u32 256, 8
    %1492 = vbcast.lane.b32.xlu0 %v1486, %s1491
    %v1493 = vpop.permute.xlu0 %1492
    %v1526 = vmul.f32 %v1006, %v1324
    %v1527 = vmul.f32 %v1007, %v1328
    %v1528 = vmul.f32 %v1008, %v1335
    %v1529 = vmul.f32 %v1009, %v1339
    %v1530 = vmul.f32 %v1010, %v1346
    %v1531 = vmul.f32 %v1011, %v1350
    %v1532 = vmul.f32 %v1012, %v1357
    %v1533 = vmul.f32 %v1013, %v1361
    %v1534 = vmul.f32 %v1014, %v1368
    %v1535 = vmul.f32 %v1015, %v1372
    %v1536 = vmul.f32 %v1016, %v1379
    %v1537 = vmul.f32 %v1017, %v1383
    %v1538 = vmul.f32 %v1018, %v1390
    %v1539 = vmul.f32 %v1019, %v1394
    %v1540 = vmul.f32 %v1020, %v1401
    %v1541 = vmul.f32 %v1021, %v1405
    %v1542 = vmul.f32 %v1022, %v1412
    %v1543 = vmul.f32 %v1023, %v1416
    %v1544 = vmul.f32 %v1024, %v1423
    %v1545 = vmul.f32 %v1025, %v1427
    %v1546 = vmul.f32 %v1026, %v1434
    %v1547 = vmul.f32 %v1027, %v1438
    %v1548 = vmul.f32 %v1028, %v1445
    %v1549 = vmul.f32 %v1029, %v1449
    %v1550 = vmul.f32 %v1030, %v1456
    %v1551 = vmul.f32 %v1031, %v1460
    %v1552 = vmul.f32 %v1032, %v1467
    %v1553 = vmul.f32 %v1033, %v1471
    %v1554 = vmul.f32 %v1034, %v1478
    %v1555 = vmul.f32 %v1035, %v1482
    %v1556 = vmul.f32 %v1036, %v1489
    %v1557 = vmul.f32 %v1037, %v1493
    %v1558 = vld [vmem:[#allocation12] sm:$0xff]
    %v1559 = vld [vmem:[#allocation12 + $0x8] sm:$0xff]
    %v1562 = vlaneseq
    %v1563 = vshrl.u32 %v1562, 7
    %v1564 = vsub.s32 0, %v1563
    %v1565 = vrot.slane %v1558, %v1564
    %1567 = vbcast.lane.b32.xlu0 %v1565, 256
    %v1568 = vpop.permute.xlu0 %1567
    %s1570 = sor.u32 256, 8
    %1571 = vbcast.lane.b32.xlu0 %v1565, %s1570
    %v1572 = vpop.permute.xlu0 %1571
    %v1573 = vlaneseq
    %v1574 = vshrl.u32 %v1573, 7
    %v1575 = vsub.s32 1, %v1574
    %v1576 = vrot.slane %v1558, %v1575
    %1578 = vbcast.lane.b32.xlu0 %v1576, 256
    %v1579 = vpop.permute.xlu0 %1578
    %s1581 = sor.u32 256, 8
    %1582 = vbcast.lane.b32.xlu0 %v1576, %s1581
    %v1583 = vpop.permute.xlu0 %1582
    %v1584 = vlaneseq
    %v1585 = vshrl.u32 %v1584, 7
    %v1586 = vsub.s32 2, %v1585
    %v1587 = vrot.slane %v1558, %v1586
    %1589 = vbcast.lane.b32.xlu0 %v1587, 256
    %v1590 = vpop.permute.xlu0 %1589
    %s1592 = sor.u32 256, 8
    %1593 = vbcast.lane.b32.xlu0 %v1587, %s1592
    %v1594 = vpop.permute.xlu0 %1593
    %v1595 = vlaneseq
    %v1596 = vshrl.u32 %v1595, 7
    %v1597 = vsub.s32 3, %v1596
    %v1598 = vrot.slane %v1558, %v1597
    %1600 = vbcast.lane.b32.xlu0 %v1598, 256
    %v1601 = vpop.permute.xlu0 %1600
    %s1603 = sor.u32 256, 8
    %1604 = vbcast.lane.b32.xlu0 %v1598, %s1603
    %v1605 = vpop.permute.xlu0 %1604
    %v1606 = vlaneseq
    %v1607 = vshrl.u32 %v1606, 7
    %v1608 = vsub.s32 4, %v1607
    %v1609 = vrot.slane %v1558, %v1608
    %1611 = vbcast.lane.b32.xlu0 %v1609, 256
    %v1612 = vpop.permute.xlu0 %1611
    %s1614 = sor.u32 256, 8
    %1615 = vbcast.lane.b32.xlu0 %v1609, %s1614
    %v1616 = vpop.permute.xlu0 %1615
    %v1617 = vlaneseq
    %v1618 = vshrl.u32 %v1617, 7
    %v1619 = vsub.s32 5, %v1618
    %v1620 = vrot.slane %v1558, %v1619
    %1622 = vbcast.lane.b32.xlu0 %v1620, 256
    %v1623 = vpop.permute.xlu0 %1622
    %s1625 = sor.u32 256, 8
    %1626 = vbcast.lane.b32.xlu0 %v1620, %s1625
    %v1627 = vpop.permute.xlu0 %1626
    %v1628 = vlaneseq
    %v1629 = vshrl.u32 %v1628, 7
    %v1630 = vsub.s32 6, %v1629
    %v1631 = vrot.slane %v1558, %v1630
    %1633 = vbcast.lane.b32.xlu0 %v1631, 256
    %v1634 = vpop.permute.xlu0 %1633
    %s1636 = sor.u32 256, 8
    %1637 = vbcast.lane.b32.xlu0 %v1631, %s1636
    %v1638 = vpop.permute.xlu0 %1637
    %v1639 = vlaneseq
    %v1640 = vshrl.u32 %v1639, 7
    %v1641 = vsub.s32 7, %v1640
    %v1642 = vrot.slane %v1558, %v1641
    %1644 = vbcast.lane.b32.xlu0 %v1642, 256
    %v1645 = vpop.permute.xlu0 %1644
    %s1647 = sor.u32 256, 8
    %1648 = vbcast.lane.b32.xlu0 %v1642, %s1647
    %v1649 = vpop.permute.xlu0 %1648
    %v1650 = vlaneseq
    %v1651 = vshrl.u32 %v1650, 7
    %v1652 = vsub.s32 0, %v1651
    %v1653 = vrot.slane %v1559, %v1652
    %1655 = vbcast.lane.b32.xlu0 %v1653, 256
    %v1656 = vpop.permute.xlu0 %1655
    %s1658 = sor.u32 256, 8
    %1659 = vbcast.lane.b32.xlu0 %v1653, %s1658
    %v1660 = vpop.permute.xlu0 %1659
    %v1661 = vlaneseq
    %v1662 = vshrl.u32 %v1661, 7
    %v1663 = vsub.s32 1, %v1662
    %v1664 = vrot.slane %v1559, %v1663
    %1666 = vbcast.lane.b32.xlu0 %v1664, 256
    %v1667 = vpop.permute.xlu0 %1666
    %s1669 = sor.u32 256, 8
    %1670 = vbcast.lane.b32.xlu0 %v1664, %s1669
    %v1671 = vpop.permute.xlu0 %1670
    %v1672 = vlaneseq
    %v1673 = vshrl.u32 %v1672, 7
    %v1674 = vsub.s32 2, %v1673
    %v1675 = vrot.slane %v1559, %v1674
    %1677 = vbcast.lane.b32.xlu0 %v1675, 256
    %v1678 = vpop.permute.xlu0 %1677
    %s1680 = sor.u32 256, 8
    %1681 = vbcast.lane.b32.xlu0 %v1675, %s1680
    %v1682 = vpop.permute.xlu0 %1681
    %v1683 = vlaneseq
    %v1684 = vshrl.u32 %v1683, 7
    %v1685 = vsub.s32 3, %v1684
    %v1686 = vrot.slane %v1559, %v1685
    %1688 = vbcast.lane.b32.xlu0 %v1686, 256
    %v1689 = vpop.permute.xlu0 %1688
    %s1691 = sor.u32 256, 8
    %1692 = vbcast.lane.b32.xlu0 %v1686, %s1691
    %v1693 = vpop.permute.xlu0 %1692
    %v1694 = vlaneseq
    %v1695 = vshrl.u32 %v1694, 7
    %v1696 = vsub.s32 4, %v1695
    %v1697 = vrot.slane %v1559, %v1696
    %1699 = vbcast.lane.b32.xlu0 %v1697, 256
    %v1700 = vpop.permute.xlu0 %1699
    %s1702 = sor.u32 256, 8
    %1703 = vbcast.lane.b32.xlu0 %v1697, %s1702
    %v1704 = vpop.permute.xlu0 %1703
    %v1705 = vlaneseq
    %v1706 = vshrl.u32 %v1705, 7
    %v1707 = vsub.s32 5, %v1706
    %v1708 = vrot.slane %v1559, %v1707
    %1710 = vbcast.lane.b32.xlu0 %v1708, 256
    %v1711 = vpop.permute.xlu0 %1710
    %s1713 = sor.u32 256, 8
    %1714 = vbcast.lane.b32.xlu0 %v1708, %s1713
    %v1715 = vpop.permute.xlu0 %1714
    %v1716 = vlaneseq
    %v1717 = vshrl.u32 %v1716, 7
    %v1718 = vsub.s32 6, %v1717
    %v1719 = vrot.slane %v1559, %v1718
    %1721 = vbcast.lane.b32.xlu0 %v1719, 256
    %v1722 = vpop.permute.xlu0 %1721
    %s1724 = sor.u32 256, 8
    %1725 = vbcast.lane.b32.xlu0 %v1719, %s1724
    %v1726 = vpop.permute.xlu0 %1725
    %v1727 = vlaneseq
    %v1728 = vshrl.u32 %v1727, 7
    %v1729 = vsub.s32 7, %v1728
    %v1730 = vrot.slane %v1559, %v1729
    %1732 = vbcast.lane.b32.xlu0 %v1730, 256
    %v1733 = vpop.permute.xlu0 %1732
    %s1735 = sor.u32 256, 8
    %1736 = vbcast.lane.b32.xlu0 %v1730, %s1735
    %v1737 = vpop.permute.xlu0 %1736
    %v1770 = vmul.f32 %v1280, %v1568
    %v1771 = vmul.f32 %v1281, %v1572
    %v1772 = vmul.f32 %v1282, %v1579
    %v1773 = vmul.f32 %v1283, %v1583
    %v1774 = vmul.f32 %v1284, %v1590
    %v1775 = vmul.f32 %v1285, %v1594
    %v1776 = vmul.f32 %v1286, %v1601
    %v1777 = vmul.f32 %v1287, %v1605
    %v1778 = vmul.f32 %v1288, %v1612
    %v1779 = vmul.f32 %v1289, %v1616
    %v1780 = vmul.f32 %v1290, %v1623
    %v1781 = vmul.f32 %v1291, %v1627
    %v1782 = vmul.f32 %v1292, %v1634
    %v1783 = vmul.f32 %v1293, %v1638
    %v1784 = vmul.f32 %v1294, %v1645
    %v1785 = vmul.f32 %v1295, %v1649
    %v1786 = vmul.f32 %v1296, %v1656
    %v1787 = vmul.f32 %v1297, %v1660
    %v1788 = vmul.f32 %v1298, %v1667
    %v1789 = vmul.f32 %v1299, %v1671
    %v1790 = vmul.f32 %v1300, %v1678
    %v1791 = vmul.f32 %v1301, %v1682
    %v1792 = vmul.f32 %v1302, %v1689
    %v1793 = vmul.f32 %v1303, %v1693
    %v1794 = vmul.f32 %v1304, %v1700
    %v1795 = vmul.f32 %v1305, %v1704
    %v1796 = vmul.f32 %v1306, %v1711
    %v1797 = vmul.f32 %v1307, %v1715
    %v1798 = vmul.f32 %v1308, %v1722
    %v1799 = vmul.f32 %v1309, %v1726
    %v1800 = vmul.f32 %v1310, %v1733
    %v1801 = vmul.f32 %v1311, %v1737
    %v1802 = vadd.f32 %v1526, %v1770
    %v1803 = vadd.f32 %v1527, %v1771
    %v1804 = vadd.f32 %v1528, %v1772
    %v1805 = vadd.f32 %v1529, %v1773
    %v1806 = vadd.f32 %v1530, %v1774
    %v1807 = vadd.f32 %v1531, %v1775
    %v1808 = vadd.f32 %v1532, %v1776
    %v1809 = vadd.f32 %v1533, %v1777
    %v1810 = vadd.f32 %v1534, %v1778
    %v1811 = vadd.f32 %v1535, %v1779
    %v1812 = vadd.f32 %v1536, %v1780
    %v1813 = vadd.f32 %v1537, %v1781
    %v1814 = vadd.f32 %v1538, %v1782
    %v1815 = vadd.f32 %v1539, %v1783
    %v1816 = vadd.f32 %v1540, %v1784
    %v1817 = vadd.f32 %v1541, %v1785
    %v1818 = vadd.f32 %v1542, %v1786
    %v1819 = vadd.f32 %v1543, %v1787
    %v1820 = vadd.f32 %v1544, %v1788
    %v1821 = vadd.f32 %v1545, %v1789
    %v1822 = vadd.f32 %v1546, %v1790
    %v1823 = vadd.f32 %v1547, %v1791
    %v1824 = vadd.f32 %v1548, %v1792
    %v1825 = vadd.f32 %v1549, %v1793
    %v1826 = vadd.f32 %v1550, %v1794
    %v1827 = vadd.f32 %v1551, %v1795
    %v1828 = vadd.f32 %v1552, %v1796
    %v1829 = vadd.f32 %v1553, %v1797
    %v1830 = vadd.f32 %v1554, %v1798
    %v1831 = vadd.f32 %v1555, %v1799
    %v1832 = vadd.f32 %v1556, %v1800
    %v1833 = vadd.f32 %v1557, %v1801
    %1866 = vset.pattern.permute.xlu0 0
    %1867 = vperm.xlu0 %1866, %v1802
    %v1868 = vpop.permute.xlu0 %1867
    %1869 = vset.pattern.permute.xlu0 0
    %1870 = vperm.xlu0 %1869, %v1803
    %v1871 = vpop.permute.xlu0 %1870
    %1872 = vset.pattern.permute.xlu0 0
    %1873 = vperm.xlu0 %1872, %v1804
    %v1874 = vpop.permute.xlu0 %1873
    %1875 = vset.pattern.permute.xlu0 0
    %1876 = vperm.xlu0 %1875, %v1805
    %v1877 = vpop.permute.xlu0 %1876
    %1878 = vset.pattern.permute.xlu0 0
    %1879 = vperm.xlu0 %1878, %v1806
    %v1880 = vpop.permute.xlu0 %1879
    %1881 = vset.pattern.permute.xlu0 0
    %1882 = vperm.xlu0 %1881, %v1807
    %v1883 = vpop.permute.xlu0 %1882
    %1884 = vset.pattern.permute.xlu0 0
    %1885 = vperm.xlu0 %1884, %v1808
    %v1886 = vpop.permute.xlu0 %1885
    %1887 = vset.pattern.permute.xlu0 0
    %1888 = vperm.xlu0 %1887, %v1809
    %v1889 = vpop.permute.xlu0 %1888
    %1890 = vset.pattern.permute.xlu0 0
    %1891 = vperm.xlu0 %1890, %v1810
    %v1892 = vpop.permute.xlu0 %1891
    %1893 = vset.pattern.permute.xlu0 0
    %1894 = vperm.xlu0 %1893, %v1811
    %v1895 = vpop.permute.xlu0 %1894
    %1896 = vset.pattern.permute.xlu0 0
    %1897 = vperm.xlu0 %1896, %v1812
    %v1898 = vpop.permute.xlu0 %1897
    %1899 = vset.pattern.permute.xlu0 0
    %1900 = vperm.xlu0 %1899, %v1813
    %v1901 = vpop.permute.xlu0 %1900
    %1902 = vset.pattern.permute.xlu0 0
    %1903 = vperm.xlu0 %1902, %v1814
    %v1904 = vpop.permute.xlu0 %1903
    %1905 = vset.pattern.permute.xlu0 0
    %1906 = vperm.xlu0 %1905, %v1815
    %v1907 = vpop.permute.xlu0 %1906
    %1908 = vset.pattern.permute.xlu0 0
    %1909 = vperm.xlu0 %1908, %v1816
    %v1910 = vpop.permute.xlu0 %1909
    %1911 = vset.pattern.permute.xlu0 0
    %1912 = vperm.xlu0 %1911, %v1817
    %v1913 = vpop.permute.xlu0 %1912
    %1914 = vset.pattern.permute.xlu0 0
    %1915 = vperm.xlu0 %1914, %v1818
    %v1916 = vpop.permute.xlu0 %1915
    %1917 = vset.pattern.permute.xlu0 0
    %1918 = vperm.xlu0 %1917, %v1819
    %v1919 = vpop.permute.xlu0 %1918
    %1920 = vset.pattern.permute.xlu0 0
    %1921 = vperm.xlu0 %1920, %v1820
    %v1922 = vpop.permute.xlu0 %1921
    %1923 = vset.pattern.permute.xlu0 0
    %1924 = vperm.xlu0 %1923, %v1821
    %v1925 = vpop.permute.xlu0 %1924
    %1926 = vset.pattern.permute.xlu0 0
    %1927 = vperm.xlu0 %1926, %v1822
    %v1928 = vpop.permute.xlu0 %1927
    %1929 = vset.pattern.permute.xlu0 0
    %1930 = vperm.xlu0 %1929, %v1823
    %v1931 = vpop.permute.xlu0 %1930
    %1932 = vset.pattern.permute.xlu0 0
    %1933 = vperm.xlu0 %1932, %v1824
    %v1934 = vpop.permute.xlu0 %1933
    %1935 = vset.pattern.permute.xlu0 0
    %1936 = vperm.xlu0 %1935, %v1825
    %v1937 = vpop.permute.xlu0 %1936
    %1938 = vset.pattern.permute.xlu0 0
    %1939 = vperm.xlu0 %1938, %v1826
    %v1940 = vpop.permute.xlu0 %1939
    %1941 = vset.pattern.permute.xlu0 0
    %1942 = vperm.xlu0 %1941, %v1827
    %v1943 = vpop.permute.xlu0 %1942
    %1944 = vset.pattern.permute.xlu0 0
    %1945 = vperm.xlu0 %1944, %v1828
    %v1946 = vpop.permute.xlu0 %1945
    %1947 = vset.pattern.permute.xlu0 0
    %1948 = vperm.xlu0 %1947, %v1829
    %v1949 = vpop.permute.xlu0 %1948
    %1950 = vset.pattern.permute.xlu0 0
    %1951 = vperm.xlu0 %1950, %v1830
    %v1952 = vpop.permute.xlu0 %1951
    %1953 = vset.pattern.permute.xlu0 0
    %1954 = vperm.xlu0 %1953, %v1831
    %v1955 = vpop.permute.xlu0 %1954
    %1956 = vset.pattern.permute.xlu0 0
    %1957 = vperm.xlu0 %1956, %v1832
    %v1958 = vpop.permute.xlu0 %1957
    %1959 = vset.pattern.permute.xlu0 0
    %1960 = vperm.xlu0 %1959, %v1833
    %v1961 = vpop.permute.xlu0 %1960
    %v1962 = vlaneseq
    %v1963 = vand.u32 %v1962, 127
    %v1964 = vlaneseq
    %v1965 = vshrl.u32 %v1964, 7
    %v1966 = vsub.s32 %v1963, %v1965
    %v1967 = vrot.slane %v1868, %v1966
    %v1968 = vadd.s32 %v1963, 4294967288
    %v1969 = vlaneseq
    %v1970 = vshrl.u32 %v1969, 7
    %v1971 = vsub.s32 %v1968, %v1970
    %v1972 = vrot.slane %v1871, %v1971
    %vm1973 = vcmask 130112
    %v1974 = vsel %vm1973, %v1972, %v1967
    %v1975 = vlaneseq
    %v1976 = vshrl.u32 %v1975, 7
    %v1977 = vsub.s32 %v1963, %v1976
    %v1978 = vrot.slane %v1874, %v1977
    %v1979 = vlaneseq
    %v1980 = vshrl.u32 %v1979, 7
    %v1981 = vsub.s32 %v1968, %v1980
    %v1982 = vrot.slane %v1877, %v1981
    %v1983 = vsel %vm1973, %v1982, %v1978
    %v1984 = vlaneseq
    %v1985 = vshrl.u32 %v1984, 7
    %v1986 = vsub.s32 %v1963, %v1985
    %v1987 = vrot.slane %v1880, %v1986
    %v1988 = vlaneseq
    %v1989 = vshrl.u32 %v1988, 7
    %v1990 = vsub.s32 %v1968, %v1989
    %v1991 = vrot.slane %v1883, %v1990
    %v1992 = vsel %vm1973, %v1991, %v1987
    %v1993 = vlaneseq
    %v1994 = vshrl.u32 %v1993, 7
    %v1995 = vsub.s32 %v1963, %v1994
    %v1996 = vrot.slane %v1886, %v1995
    %v1997 = vlaneseq
    %v1998 = vshrl.u32 %v1997, 7
    %v1999 = vsub.s32 %v1968, %v1998
    %v2000 = vrot.slane %v1889, %v1999
    %v2001 = vsel %vm1973, %v2000, %v1996
    %v2002 = vlaneseq
    %v2003 = vshrl.u32 %v2002, 7
    %v2004 = vsub.s32 %v1963, %v2003
    %v2005 = vrot.slane %v1892, %v2004
    %v2006 = vlaneseq
    %v2007 = vshrl.u32 %v2006, 7
    %v2008 = vsub.s32 %v1968, %v2007
    %v2009 = vrot.slane %v1895, %v2008
    %v2010 = vsel %vm1973, %v2009, %v2005
    %v2011 = vlaneseq
    %v2012 = vshrl.u32 %v2011, 7
    %v2013 = vsub.s32 %v1963, %v2012
    %v2014 = vrot.slane %v1898, %v2013
    %v2015 = vlaneseq
    %v2016 = vshrl.u32 %v2015, 7
    %v2017 = vsub.s32 %v1968, %v2016
    %v2018 = vrot.slane %v1901, %v2017
    %v2019 = vsel %vm1973, %v2018, %v2014
    %v2020 = vlaneseq
    %v2021 = vshrl.u32 %v2020, 7
    %v2022 = vsub.s32 %v1963, %v2021
    %v2023 = vrot.slane %v1904, %v2022
    %v2024 = vlaneseq
    %v2025 = vshrl.u32 %v2024, 7
    %v2026 = vsub.s32 %v1968, %v2025
    %v2027 = vrot.slane %v1907, %v2026
    %v2028 = vsel %vm1973, %v2027, %v2023
    %v2029 = vlaneseq
    %v2030 = vshrl.u32 %v2029, 7
    %v2031 = vsub.s32 %v1963, %v2030
    %v2032 = vrot.slane %v1910, %v2031
    %v2033 = vlaneseq
    %v2034 = vshrl.u32 %v2033, 7
    %v2035 = vsub.s32 %v1968, %v2034
    %v2036 = vrot.slane %v1913, %v2035
    %v2037 = vsel %vm1973, %v2036, %v2032
    %v2038 = vlaneseq
    %v2039 = vshrl.u32 %v2038, 7
    %v2040 = vsub.s32 %v1963, %v2039
    %v2041 = vrot.slane %v1916, %v2040
    %v2042 = vlaneseq
    %v2043 = vshrl.u32 %v2042, 7
    %v2044 = vsub.s32 %v1968, %v2043
    %v2045 = vrot.slane %v1919, %v2044
    %v2046 = vsel %vm1973, %v2045, %v2041
    %v2047 = vlaneseq
    %v2048 = vshrl.u32 %v2047, 7
    %v2049 = vsub.s32 %v1963, %v2048
    %v2050 = vrot.slane %v1922, %v2049
    %v2051 = vlaneseq
    %v2052 = vshrl.u32 %v2051, 7
    %v2053 = vsub.s32 %v1968, %v2052
    %v2054 = vrot.slane %v1925, %v2053
    %v2055 = vsel %vm1973, %v2054, %v2050
    %v2056 = vlaneseq
    %v2057 = vshrl.u32 %v2056, 7
    %v2058 = vsub.s32 %v1963, %v2057
    %v2059 = vrot.slane %v1928, %v2058
    %v2060 = vlaneseq
    %v2061 = vshrl.u32 %v2060, 7
    %v2062 = vsub.s32 %v1968, %v2061
    %v2063 = vrot.slane %v1931, %v2062
    %v2064 = vsel %vm1973, %v2063, %v2059
    %v2065 = vlaneseq
    %v2066 = vshrl.u32 %v2065, 7
    %v2067 = vsub.s32 %v1963, %v2066
    %v2068 = vrot.slane %v1934, %v2067
    %v2069 = vlaneseq
    %v2070 = vshrl.u32 %v2069, 7
    %v2071 = vsub.s32 %v1968, %v2070
    %v2072 = vrot.slane %v1937, %v2071
    %v2073 = vsel %vm1973, %v2072, %v2068
    %v2074 = vlaneseq
    %v2075 = vshrl.u32 %v2074, 7
    %v2076 = vsub.s32 %v1963, %v2075
    %v2077 = vrot.slane %v1940, %v2076
    %v2078 = vlaneseq
    %v2079 = vshrl.u32 %v2078, 7
    %v2080 = vsub.s32 %v1968, %v2079
    %v2081 = vrot.slane %v1943, %v2080
    %v2082 = vsel %vm1973, %v2081, %v2077
    %v2083 = vlaneseq
    %v2084 = vshrl.u32 %v2083, 7
    %v2085 = vsub.s32 %v1963, %v2084
    %v2086 = vrot.slane %v1946, %v2085
    %v2087 = vlaneseq
    %v2088 = vshrl.u32 %v2087, 7
    %v2089 = vsub.s32 %v1968, %v2088
    %v2090 = vrot.slane %v1949, %v2089
    %v2091 = vsel %vm1973, %v2090, %v2086
    %v2092 = vlaneseq
    %v2093 = vshrl.u32 %v2092, 7
    %v2094 = vsub.s32 %v1963, %v2093
    %v2095 = vrot.slane %v1952, %v2094
    %v2096 = vlaneseq
    %v2097 = vshrl.u32 %v2096, 7
    %v2098 = vsub.s32 %v1968, %v2097
    %v2099 = vrot.slane %v1955, %v2098
    %v2100 = vsel %vm1973, %v2099, %v2095
    %v2101 = vlaneseq
    %v2102 = vshrl.u32 %v2101, 7
    %v2103 = vsub.s32 %v1963, %v2102
    %v2104 = vrot.slane %v1958, %v2103
    %v2105 = vlaneseq
    %v2106 = vshrl.u32 %v2105, 7
    %v2107 = vsub.s32 %v1968, %v2106
    %v2108 = vrot.slane %v1961, %v2107
    %v2109 = vsel %vm1973, %v2108, %v2104
    %vm2110 = vcmask 1041409
    %v2111 = vsel %vm2110, %v1983, %v1974
    %vm2112 = vcmask 1042434
    %v2113 = vsel %vm2112, %v1992, %v2111
    %vm2114 = vcmask 1043459
    %v2115 = vsel %vm2114, %v2001, %v2113
    %vm2116 = vcmask 1044484
    %v2117 = vsel %vm2116, %v2010, %v2115
    %vm2118 = vcmask 1045509
    %v2119 = vsel %vm2118, %v2019, %v2117
    %vm2120 = vcmask 1046534
    %v2121 = vsel %vm2120, %v2028, %v2119
    %vm2122 = vcmask 1047559
    %v2123 = vsel %vm2122, %v2037, %v2121
    %v2124 = vsel %vm2110, %v2055, %v2046
    %v2125 = vsel %vm2112, %v2064, %v2124
    %v2126 = vsel %vm2114, %v2073, %v2125
    %v2127 = vsel %vm2116, %v2082, %v2126
    %v2128 = vsel %vm2118, %v2091, %v2127
    %v2129 = vsel %vm2120, %v2100, %v2128
    %v2130 = vsel %vm2122, %v2109, %v2129
    %v2133 = vadd.f32 %v1312, %v2123
    %v2134 = vadd.f32 %v1313, %v2130
    %vm2135 = vcmask 130048
    %2136 = vst.msk [vmem:[#allocation13] sm:$0xff] %vm2135, %v2133
    %2137 = vst.msk [vmem:[#allocation13 + $0x8] sm:$0xff] %vm2135, %v2134
    // Predicated region
    $region46: #{tpu_custom_call.1} parent=1 // pred_check
      _
    $region47: #{tpu_custom_call.1} parent=1 // pred_check_branch
      %2139 = sbr.rel (0) target = $region49
    $region48: #{tpu_custom_call.1} parent=1 // pred_region
      %s2141 = ssub.s32 256, 256
      %2142 = vsyncadd [#allocation6], %s2141
      %s2143 = sshll.u32 [#allocation13], 4
      %s2144 = int_to_ptr.vmem [resolvable:$true] %s2143
      %2149 = dma.vmem_to_hbm [thread:$0]  %s2144, 256, %s5, [#allocation6], 128, 128, 8
    $region49: #{tpu_custom_call.1} parent=1 // pred_fallthru
      _
    // Predicated region
    $region50: #{tpu_custom_call.1} parent=1 // pred_check
      _
    $region51: #{tpu_custom_call.1} parent=1 // pred_check_branch
      %2151 = sbr.rel (0) target = $region53
    $region52: #{tpu_custom_call.1} parent=1 // pred_region
      %2152 = dma.done [#allocation6], 256
    $region53: #{tpu_custom_call.1} parent=1 // pred_fallthru
      _
    %2153 = vsyncpa [#allocation5], 1
    %2154 = vsyncpa [#allocation8], 1
    %2155 = vsyncpa [#allocation11], 1
    %2156 = vsyncpa [#allocation6], 1

</llo_original>
